<compile_context>
chip_gen: v5e
topology: v5e:2x2
jax: 0.10.0
libtpu: 0.0.40
codegen_flags: <defaults>
</compile_context>

<pallas_src>
import functools

import jax
import jax.numpy as jnp
from jax.experimental import pallas as pl
from jax.experimental.pallas import tpu as pltpu

OUT_W = 128   # lane-dense score block width; columns 0..5 hold the real scores


# ----------------------------------------------------------------------------- disc math
def _disc_scores(h_pl, h_mi, s1, s2, f1, f2, whh_ref, wi_ref, bc_ref, scal_ref):
    """Three bilinear scorers.  Returns an (N, OUT_W) lane-dense block whose first six
       columns are [e_pos, e_neg, i_pos, i_neg, j_pos, j_neg]."""
    n = h_pl.shape[0]
    we_t = whh_ref[0]                        # (H, H) extrinsic bilinear (pre-transposed)
    wj = whh_ref[1]                          # (H, H) joint bilinear
    wc_t = whh_ref[2]                        # (H, H) linear_c weight^T
    bc = bc_ref[...]                         # (1, H)
    be = scal_ref[0]                         # scalar biases (SMEM)
    bi = scal_ref[1]
    bj = scal_ref[2]

    # summary vector c = mean over nodes of the positive embedding (torch.mean(h_1, 0))
    c_row = jnp.sum(h_pl, axis=0, keepdims=True) * (1.0 / n)                # (1, H)

    # extrinsic: h @ We @ c  ==  sum(h * (c @ We^T), -1)   (one (1,H)x(H,H) product)
    q_e = jnp.dot(c_row, we_t, preferred_element_type=jnp.float32)          # (1, H)
    e_pos = jnp.sum(h_pl * q_e, axis=-1, keepdims=True) + be
    e_neg = jnp.sum(h_mi * q_e, axis=-1, keepdims=True) + be

    # intrinsic: bilinear(h1, features)   (pos: seq1, neg: seq2)
    hwi = jnp.dot(h_pl, wi_ref[...], preferred_element_type=jnp.float32)    # (N, F)
    i_pos = jnp.sum(hwi * s1, axis=-1, keepdims=True) + bi
    i_neg = jnp.sum(hwi * s2, axis=-1, keepdims=True) + bi

    # joint: bilinear(h, tanh(linear_c(c) + linear_f(f)));  f-projections hoisted (f1, f2)
    c_proj = jnp.dot(c_row, wc_t, preferred_element_type=jnp.float32) + bc  # (1, H)
    cf1 = jnp.tanh(c_proj + f1)
    cf2 = jnp.tanh(c_proj + f2)
    j_pos = jnp.sum(jnp.dot(h_pl, wj, preferred_element_type=jnp.float32) * cf1,
                    axis=-1, keepdims=True) + bj
    j_neg = jnp.sum(jnp.dot(h_mi, wj, preferred_element_type=jnp.float32) * cf2,
                    axis=-1, keepdims=True) + bj

    pad = jnp.zeros((n, OUT_W - 6), jnp.float32)
    return jnp.concatenate([e_pos, e_neg, i_pos, i_neg, j_pos, j_neg, pad], axis=1)


# ------------------------------------------------------------------------ fused HDMI kernel
def _hdmi_kernel(seq1_ref, seq2_ref, f1_ref, f2_ref, adj_ref, gcnw_ref, gcnb_ref,
                 vatt_ref, whh_ref, wi_ref, bc_ref, scal_ref,
                 pernet_ref, fusion_ref, acc_scr, h_scr,
                 *, n_networks, hid, n_ktiles):
    g = pl.program_id(0)
    k = pl.program_id(1)
    G, H, KT = n_networks, hid, n_ktiles
    TK = adj_ref.shape[2]

    # -------- K-tiled GCN aggregation: acc += adj[:, kTK:kTK+TK] @ xw[kTK:kTK+TK, :]
    start = pl.multiple_of(k * TK, TK)
    s1_k = seq1_ref[pl.ds(start, TK), :]
    s2_k = seq2_ref[pl.ds(start, TK), :]
    w_g = gcnw_ref[0]                                              # (F, H)
    xw_k = jnp.concatenate(
        [jnp.dot(s1_k, w_g, preferred_element_type=jnp.float32),
         jnp.dot(s2_k, w_g, preferred_element_type=jnp.float32)],
        axis=1).astype(jnp.bfloat16)                               # (TK, 2H) bf16
    partial = jnp.dot(adj_ref[0], xw_k,
                      preferred_element_type=jnp.float32)          # (N, 2H) f32 accumulate

    @pl.when(k == 0)
    def _():
        acc_scr[...] = jnp.zeros_like(acc_scr)
    acc_scr[...] += partial

    # -------- last K tile of this network: bias + PReLU, per-network discriminator
    @pl.when(k == KT - 1)
    def _():
        b_g = gcnb_ref[0]                                          # (1, H)
        h12 = acc_scr[...] + jnp.concatenate([b_g, b_g], axis=1)
        alpha = scal_ref[3 + g]                                    # per-network PReLU slope
        h12 = jnp.where(h12 > 0, h12, alpha * h12)
        h_scr[g] = h12                                             # stash for the combine
        pernet_ref[0] = _disc_scores(h12[:, :H], h12[:, H:],
                                     seq1_ref[...], seq2_ref[...],
                                     f1_ref[...], f2_ref[...],
                                     whh_ref, wi_ref, bc_ref, scal_ref)

    # -------- very last step: attention combine over networks + fusion discriminator
    @pl.when(jnp.logical_and(g == G - 1, k == KT - 1))
    def _():
        # One (N,2H)x(2H,2) block-diag matmul per network scores BOTH views at once.
        scores = []
        for kk in range(G):                                        # G static -> unrolled
            v_k = vatt_ref[kk]                                     # (H, 1) = Ww^T @ Wy^T
            z = jnp.zeros_like(v_k)
            v2 = jnp.concatenate([jnp.concatenate([v_k, z], axis=1),
                                  jnp.concatenate([z, v_k], axis=1)], axis=0)   # (2H, 2)
            yb_k = scal_ref[3 + G + kk]
            scores.append(jnp.tanh(
                jnp.dot(h_scr[kk], v2, preferred_element_type=jnp.float32) + yb_k))

        # softmax over networks (independent per view), fully unrolled
        m = scores[0]
        for kk in range(1, G):
            m = jnp.maximum(m, scores[kk])
        e = [jnp.exp(s - m) for s in scores]
        d = e[0]
        for kk in range(1, G):
            d = d + e[kk]
        inv_d = pl.reciprocal(d, approx=True)                      # EUP slot, no divides

        w0 = e[0] * inv_d                                          # (N, 2) softmax weights
        h1c = w0[:, 0:1] * h_scr[0][:, :H]
        h2c = w0[:, 1:2] * h_scr[0][:, H:]
        for kk in range(1, G):
            w_kk = e[kk] * inv_d
            h1c = h1c + w_kk[:, 0:1] * h_scr[kk][:, :H]
            h2c = h2c + w_kk[:, 1:2] * h_scr[kk][:, H:]

        fusion_ref[...] = _disc_scores(h1c, h2c, seq1_ref[...], seq2_ref[...],
                                       f1_ref[...], f2_ref[...],
                                       whh_ref, wi_ref, bc_ref, scal_ref)


# ------------------------------------------------------------------------------- wrapper
def _pick_tk(n):
    """Lane-aligned K tile for the adjacency reduction (full dim if N not 128-aligned).
       TODO(synk): could be widened (e.g. 2048) on v5e/v6e (128 MiB VMEM) vs v7x (64 MiB)."""
    for tk in (1024, 512, 256, 128):
        if n % tk == 0:
            return tk
    return n


def _vmem_limit_bytes():
    # explicit per-generation scoped-VMEM budget (leaves pipelining headroom on v7x)
    try:
        cap = int(pltpu.get_tpu_info().vmem_capacity_bytes)
    except Exception:
        cap = 64 * 1024 * 1024
    return int(min(int(0.75 * cap), 96 * 1024 * 1024))


def hdmi_fused_forward(params, seq1, seq2, adj):
    """Returns (per_net (G,N,OUT_W), fusion (N,OUT_W)) score blocks from one pallas_call."""
    N, F = seq1.shape
    G = adj.shape[0]
    H = params["gcn_w"].shape[2]
    TK = _pick_tk(N)
    KT = N // TK

    # --- tiny wrapper-side precompute (one-off XLA ops, hoisted out of the kernel) ---
    f1p = seq1 @ params["disc"]["wf"] + params["disc"]["b_f"]       # (N, H)  s1@Wf^T + bf
    f2p = seq2 @ params["disc"]["wf"] + params["disc"]["b_f"]       # (N, H)  s2@Wf^T + bf
    v_att = jnp.matmul(params["w_att"], params["y_att"])            # (G, H, 1) = Ww^T @ Wy^T
    adj_bf16 = adj.astype(jnp.bfloat16)                             # stream adj in bf16

    kernel = functools.partial(_hdmi_kernel, n_networks=G, hid=H, n_ktiles=KT)

    adj_map = lambda g, k: (g, 0, k)
    if KT >= 3:   # triple-buffer streamed adj tiles once the reduction is deep enough
        adj_spec = pl.BlockSpec((1, N, TK), adj_map, pipeline_mode=pl.Buffered(3))
    else:
        adj_spec = pl.BlockSpec((1, N, TK), adj_map)

    grid_spec = pltpu.PrefetchScalarGridSpec(
        num_scalar_prefetch=0,
        grid=(G, KT),                                               # reduction axis last
        in_specs=[
            pl.BlockSpec((N, F), lambda g, k: (0, 0)),              # seq1  (resident)
            pl.BlockSpec((N, F), lambda g, k: (0, 0)),              # seq2  (resident)
            pl.BlockSpec((N, H), lambda g, k: (0, 0)),              # seq1@Wf^T+bf (resident)
            pl.BlockSpec((N, H), lambda g, k: (0, 0)),              # seq2@Wf^T+bf (resident)
            adj_spec,                                               # adj[g, :, k-tile] bf16
            pl.BlockSpec((1, F, H), lambda g, k: (g, 0, 0)),        # gcn W[g]
            pl.BlockSpec((1, 1, H), lambda g, k: (g, 0, 0)),        # gcn bias[g]
            pl.BlockSpec((G, H, 1), lambda g, k: (0, 0, 0)),        # attention v (resident)
            pl.BlockSpec((3, H, H), lambda g, k: (0, 0, 0)),        # [We^T, Wj, Wc^T] (res.)
            pl.BlockSpec((H, F), lambda g, k: (0, 0)),              # Wi             (res.)
            pl.BlockSpec((1, H), lambda g, k: (0, 0)),              # bc             (res.)
            pl.BlockSpec(memory_space=pltpu.MemorySpace.SMEM),      # packed scalars in SMEM
        ],
        out_specs=(
            pl.BlockSpec((1, N, OUT_W), lambda g, k: (g, 0, 0)),    # per-network scores
            pl.BlockSpec((N, OUT_W), lambda g, k: (0, 0)),          # fusion scores
        ),
        scratch_shapes=[pltpu.VMEM((N, 2 * H), jnp.float32),        # GCN K-reduction acc
                        pltpu.VMEM((G, N, 2 * H), jnp.float32)],    # h per network
    )

    cost = pl.CostEstimate(
        flops=int(4 * G * N * N * H + 4 * G * N * F * H
                  + (G + 1) * (2 * N * H * F + 4 * N * H * H + 4 * H * H)
                  + 4 * G * N * H),
        transcendentals=int((G + 1) * 2 * N * H + 4 * G * N),
        bytes_accessed=int(2 * G * N * N                            # bf16 adjacency stream
                           + 4 * (2 * N * F + 2 * N * H)
                           + 4 * (G * F * H + 3 * H * H + H * F + G * H)
                           + 4 * (G + 1) * N * OUT_W),
    )

    return pl.pallas_call(
        kernel,
        out_shape=(jax.ShapeDtypeStruct((G, N, OUT_W), jnp.float32),
                   jax.ShapeDtypeStruct((N, OUT_W), jnp.float32)),
        grid_spec=grid_spec,
        compiler_params=pltpu.CompilerParams(
            dimension_semantics=("arbitrary", "arbitrary"),
            vmem_limit_bytes=_vmem_limit_bytes()),
        cost_estimate=cost,
    )(seq1, seq2, f1p, f2p, adj_bf16,
      params["gcn_w"], params["gcn_b"], v_att,
      params["disc"]["w_hh"], params["disc"]["wi"], params["disc"]["b_c"],
      params["scal"])


# ------------------------------------------------------------------------------ parameters
def _xavier(key, shape, fan_in, fan_out):
    a = (6.0 / (fan_in + fan_out)) ** 0.5
    return jax.random.uniform(key, shape, jnp.float32, -a, a)


def init_params(key, ft_size, hid_units, n_networks):
    F, H, G = ft_size, hid_units, n_networks
    ks = iter(jax.random.split(key, 4 * G + 8))
    params = {
        "gcn_w": jnp.stack([_xavier(next(ks), (F, H), F, H) for _ in range(G)]),  # fc.weight^T
        "gcn_b": jnp.zeros((G, 1, H), jnp.float32),
        "w_att": jnp.stack([_xavier(next(ks), (H, H), H, H) for _ in range(G)]),  # w_list[i]^T
        "y_att": jnp.stack([_xavier(next(ks), (H, 1), H, 1) for _ in range(G)]),  # y_list[i]^T
        "disc": {
            # [We^T (extrinsic, pre-transposed), Wj (joint), Wc^T (linear_c)]
            "w_hh": jnp.stack([_xavier(next(ks), (H, H), H * H, H),
                               _xavier(next(ks), (H, H), H * H, H),
                               _xavier(next(ks), (H, H), H, H)]),
            "wi": _xavier(next(ks), (H, F), H * F, H),              # Wi (intrinsic bilinear)
            "wf": _xavier(next(ks), (F, H), F, H),                  # Wf^T (linear_f)
            "b_c": jnp.zeros((1, H), jnp.float32),                  # linear_c bias
            "b_f": jnp.zeros((1, H), jnp.float32),                  # linear_f bias
        },
        # packed SMEM scalars: [be, bi, bj, alpha_0..G-1 (PReLU), yb_0..G-1 (y_list bias)]
        "scal": jnp.concatenate([jnp.zeros((3,), jnp.float32),
                                 jnp.full((G,), 0.25, jnp.float32),
                                 jnp.zeros((G,), jnp.float32)]),
    }
    return params


# -------------------------------------------------------------------------------- forward
def _split_cols(block):
    # block: (N, OUT_W), cols [e+, e-, i+, i-, j+, j-, 0...] -> (2N,) logits = cat(pos, neg)
    e = jnp.concatenate([block[:, 0], block[:, 1]])
    i = jnp.concatenate([block[:, 2], block[:, 3]])
    j = jnp.concatenate([block[:, 4], block[:, 5]])
    return e, i, j


@jax.jit
def modeler_forward(params, seq1, seq2, adj):
    """seq1/seq2: (N, F); adj: (G, N, N) dense. Mirrors modeler.forward (sparse=False)."""
    G = adj.shape[0]
    per_net, fusion = hdmi_fused_forward(params, seq1, seq2, adj)
    logits_e_list, logits_i_list, logits_j_list = [], [], []
    for g in range(G):
        e, i, j = _split_cols(per_net[g])
        logits_e_list.append(e)
        logits_i_list.append(i)
        logits_j_list.append(j)
    logits_e_fusion, logits_i_fusion, logits_j_fusion = _split_cols(fusion)
    return (logits_e_list, logits_i_list, logits_j_list,
            logits_e_fusion, logits_i_fusion, logits_j_fusion)


# ------------------------------------------------------------------------------------ main
if __name__ == "__main__":
    N, F, H, G = 16, 32, 16, 2          # nodes, ft_size, hid_units, n_networks
    key = jax.random.PRNGKey(0)
    k_feat, k_perm, k_adj, k_par = jax.random.split(key, 4)

    seq1 = jax.random.normal(k_feat, (N, F), jnp.float32)
    seq2 = seq1[jax.random.permutation(k_perm, N)]      # corrupted (row-shuffled) features

    # symmetric, self-looped, row-normalized random adjacency per network
    a = (jax.random.uniform(k_adj, (G, N, N)) < 0.3).astype(jnp.float32)
    a = jnp.minimum(a + jnp.transpose(a, (0, 2, 1)), 1.0) + jnp.eye(N, dtype=jnp.float32)[None]
    adj = a / jnp.sum(a, axis=-1, keepdims=True)

    params = init_params(k_par, F, H, G)
    outs = modeler_forward(params, seq1, seq2, adj)
    jax.block_until_ready(outs)
    print("KERNEL_OK")
</pallas_src>

<mosaic_0001>
module attributes {stable_mosaic.version = 11 : i64} {
  func.func @_hdmi_kernel(%arg0: i32, %arg1: i32, %arg2: memref<16x32xf32, #tpu.memory_space<vmem>>, %arg3: memref<16x32xf32, #tpu.memory_space<vmem>>, %arg4: memref<16x16xf32, #tpu.memory_space<vmem>>, %arg5: memref<16x16xf32, #tpu.memory_space<vmem>>, %arg6: memref<1x16x16xbf16, #tpu.memory_space<vmem>>, %arg7: memref<1x32x16xf32, #tpu.memory_space<vmem>>, %arg8: memref<1x1x16xf32, #tpu.memory_space<vmem>>, %arg9: memref<2x16x1xf32, #tpu.memory_space<vmem>>, %arg10: memref<3x16x16xf32, #tpu.memory_space<vmem>>, %arg11: memref<16x32xf32, #tpu.memory_space<vmem>>, %arg12: memref<1x16xf32, #tpu.memory_space<vmem>>, %arg13: memref<7xf32, #tpu.memory_space<smem>>, %arg14: memref<1x16x128xf32, #tpu.memory_space<vmem>>, %arg15: memref<16x128xf32, #tpu.memory_space<vmem>>, %arg16: memref<16x32xf32, #tpu.memory_space<vmem>>, %arg17: memref<2x16x32xf32, #tpu.memory_space<vmem>>) attributes {dimension_semantics = [#tpu.dimension_semantics<arbitrary>, #tpu.dimension_semantics<arbitrary>], iteration_bounds = array<i64: 2, 1>, scalar_prefetch = 0 : i64, scratch_operands = 2 : i64, tpu.core_type = #tpu.core_type<tc>, window_params = [{pipeline_mode = #tpu.pipeline_mode<synchronous>, transform_indices = @transform_0, window_bounds = array<i64: 16, 32>}, {pipeline_mode = #tpu.pipeline_mode<synchronous>, transform_indices = @transform_1, window_bounds = array<i64: 16, 32>}, {pipeline_mode = #tpu.pipeline_mode<synchronous>, transform_indices = @transform_2, window_bounds = array<i64: 16, 16>}, {pipeline_mode = #tpu.pipeline_mode<synchronous>, transform_indices = @transform_3, window_bounds = array<i64: 16, 16>}, {transform_indices = @transform_4, window_bounds = array<i64: 1, 16, 16>}, {transform_indices = @transform_5, window_bounds = array<i64: 1, 32, 16>}, {transform_indices = @transform_6, window_bounds = array<i64: 1, 1, 16>}, {pipeline_mode = #tpu.pipeline_mode<synchronous>, transform_indices = @transform_7, window_bounds = array<i64: 2, 16, 1>}, {pipeline_mode = #tpu.pipeline_mode<synchronous>, transform_indices = @transform_8, window_bounds = array<i64: 3, 16, 16>}, {pipeline_mode = #tpu.pipeline_mode<synchronous>, transform_indices = @transform_9, window_bounds = array<i64: 16, 32>}, {pipeline_mode = #tpu.pipeline_mode<synchronous>, transform_indices = @transform_10, window_bounds = array<i64: 1, 16>}, {transform_indices = @transform_11, window_bounds = array<i64: 7>}, {transform_indices = @transform_12, window_bounds = array<i64: 1, 16, 128>}, {pipeline_mode = #tpu.pipeline_mode<synchronous>, transform_indices = @transform_13, window_bounds = array<i64: 16, 128>}]} {
    %c16_i32 = arith.constant 16 : i32
    %0 = arith.muli %arg1, %c16_i32 : i32
    %1 = tpu.assume_multiple %0, 16 : i32
    %2 = arith.index_cast %1 : i32 to index
    %c0 = arith.constant 0 : index
    %3 = vector.load %arg2[%2, %c0] : memref<16x32xf32, #tpu.memory_space<vmem>>, vector<16x32xf32>
    %4 = arith.index_cast %1 : i32 to index
    %c0_0 = arith.constant 0 : index
    %5 = vector.load %arg3[%4, %c0_0] : memref<16x32xf32, #tpu.memory_space<vmem>>, vector<16x32xf32>
    %c0_1 = arith.constant 0 : index
    %c0_2 = arith.constant 0 : index
    %c0_3 = arith.constant 0 : index
    %6 = vector.load %arg7[%c0_1, %c0_2, %c0_3] : memref<1x32x16xf32, #tpu.memory_space<vmem>>, vector<1x32x16xf32>
    %7 = vector.shape_cast %6 : vector<1x32x16xf32> to vector<32x16xf32>
    %cst = arith.constant dense<0.000000e+00> : vector<16x16xf32>
    %8 = tpu.matmul %3, %7, %cst {dimension_numbers = #tpu.dot_dimension_numbers<[1], [0], [0], [1], [0, 0, 1, 1], [], []>} : vector<16x32xf32>, vector<32x16xf32>, vector<16x16xf32> -> vector<16x16xf32>
    %cst_4 = arith.constant dense<0.000000e+00> : vector<16x16xf32>
    %9 = tpu.matmul %5, %7, %cst_4 {dimension_numbers = #tpu.dot_dimension_numbers<[1], [0], [0], [1], [0, 0, 1, 1], [], []>} : vector<16x32xf32>, vector<32x16xf32>, vector<16x16xf32> -> vector<16x16xf32>
    %10 = tpu.concatenate %8, %9 in 1 : vector<16x16xf32>, vector<16x16xf32> -> vector<16x32xf32>
    %11 = arith.truncf %10 : vector<16x32xf32> to vector<16x32xbf16>
    %c0_5 = arith.constant 0 : index
    %c0_6 = arith.constant 0 : index
    %c0_7 = arith.constant 0 : index
    %12 = vector.load %arg6[%c0_5, %c0_6, %c0_7] : memref<1x16x16xbf16, #tpu.memory_space<vmem>>, vector<1x16x16xbf16>
    %13 = vector.shape_cast %12 : vector<1x16x16xbf16> to vector<16x16xbf16>
    %cst_8 = arith.constant dense<0.000000e+00> : vector<16x32xf32>
    %14 = tpu.matmul %13, %11, %cst_8 {dimension_numbers = #tpu.dot_dimension_numbers<[1], [0], [0], [1], [0, 0, 1, 1], [], []>} : vector<16x16xbf16>, vector<16x32xbf16>, vector<16x32xf32> -> vector<16x32xf32>
    %c0_i32 = arith.constant 0 : i32
    %15 = arith.cmpi eq, %arg1, %c0_i32 : i32
    %16 = arith.extui %15 : i1 to i32
    %c0_i32_9 = arith.constant 0 : i32
    %17 = arith.cmpi ne, %16, %c0_i32_9 : i32
    scf.if %17 {
      %cst_18 = arith.constant 0.000000e+00 : f32
      %29 = vector.broadcast %cst_18 : f32 to vector<16x32xf32>
      %c0_19 = arith.constant 0 : index
      %c0_20 = arith.constant 0 : index
      %30 = vector.load %arg16[%c0_19, %c0_20] : memref<16x32xf32, #tpu.memory_space<vmem>>, vector<16x32xf32>
      tpu.vector_store %arg16[%c0_19, %c0_20], %29 {strides = array<i32>} : memref<16x32xf32, #tpu.memory_space<vmem>>, vector<16x32xf32>,
    } else {
    }
    %c0_10 = arith.constant 0 : index
    %c0_11 = arith.constant 0 : index
    %18 = vector.load %arg16[%c0_10, %c0_11] : memref<16x32xf32, #tpu.memory_space<vmem>>, vector<16x32xf32>
    %19 = arith.addf %18, %14 : vector<16x32xf32>
    %c0_12 = arith.constant 0 : index
    %c0_13 = arith.constant 0 : index
    %20 = vector.load %arg16[%c0_12, %c0_13] : memref<16x32xf32, #tpu.memory_space<vmem>>, vector<16x32xf32>
    tpu.vector_store %arg16[%c0_12, %c0_13], %19 {strides = array<i32>} : memref<16x32xf32, #tpu.memory_space<vmem>>, vector<16x32xf32>,
    %c0_i32_14 = arith.constant 0 : i32
    %21 = arith.cmpi eq, %arg1, %c0_i32_14 : i32
    %22 = arith.extui %21 : i1 to i32
    %c0_i32_15 = arith.constant 0 : i32
    %23 = arith.cmpi ne, %22, %c0_i32_15 : i32
    scf.if %23 {
      %c0_18 = arith.constant 0 : index
      %c0_19 = arith.constant 0 : index
      %c0_20 = arith.constant 0 : index
      %29 = vector.load %arg8[%c0_18, %c0_19, %c0_20] : memref<1x1x16xf32, #tpu.memory_space<vmem>>, vector<1x1x16xf32>
      %30 = vector.shape_cast %29 : vector<1x1x16xf32> to vector<1x16xf32>
      %c0_21 = arith.constant 0 : index
      %c0_22 = arith.constant 0 : index
      %31 = vector.load %arg16[%c0_21, %c0_22] : memref<16x32xf32, #tpu.memory_space<vmem>>, vector<16x32xf32>
      %32 = tpu.concatenate %30, %30 in 1 : vector<1x16xf32>, vector<1x16xf32> -> vector<1x32xf32>
      %33 = vector.broadcast %32 : vector<1x32xf32> to vector<16x32xf32>
      %34 = arith.addf %31, %33 : vector<16x32xf32>
      %c3_i32 = arith.constant 3 : i32
      %35 = arith.addi %c3_i32, %arg0 : i32
      %36 = arith.index_cast %35 : i32 to index
      %37 = memref.load %arg13[%36] : memref<7xf32, #tpu.memory_space<smem>>
      %cst_23 = arith.constant 0.000000e+00 : f32
      %38 = vector.broadcast %cst_23 : f32 to vector<16x32xf32>
      %39 = arith.cmpf ogt, %34, %38 : vector<16x32xf32>
      %40 = vector.broadcast %37 : f32 to vector<16x32xf32>
      %41 = arith.mulf %40, %34 : vector<16x32xf32>
      %42 = arith.select %39, %34, %41 : vector<16x32xi1>, vector<16x32xf32>
      %43 = arith.index_cast %arg0 : i32 to index
      %c0_24 = arith.constant 0 : index
      %c0_25 = arith.constant 0 : index
      %44 = vector.load %arg17[%43, %c0_24, %c0_25] : memref<2x16x32xf32, #tpu.memory_space<vmem>>, vector<1x16x32xf32>
      %45 = vector.shape_cast %44 : vector<1x16x32xf32> to vector<16x32xf32>
      %46 = vector.shape_cast %42 : vector<16x32xf32> to vector<1x16x32xf32>
      tpu.vector_store %arg17[%43, %c0_24, %c0_25], %46 {strides = array<i32>} : memref<2x16x32xf32, #tpu.memory_space<vmem>>, vector<1x16x32xf32>,
      %47 = vector.extract_strided_slice %42 {offsets = [0, 0], sizes = [16, 16], strides = [1, 1]} : vector<16x32xf32> to vector<16x16xf32>
      %48 = vector.extract_strided_slice %42 {offsets = [0, 16], sizes = [16, 16], strides = [1, 1]} : vector<16x32xf32> to vector<16x16xf32>
      %c0_26 = arith.constant 0 : index
      %c0_27 = arith.constant 0 : index
      %49 = vector.load %arg2[%c0_26, %c0_27] : memref<16x32xf32, #tpu.memory_space<vmem>>, vector<16x32xf32>
      %c0_28 = arith.constant 0 : index
      %c0_29 = arith.constant 0 : index
      %50 = vector.load %arg3[%c0_28, %c0_29] : memref<16x32xf32, #tpu.memory_space<vmem>>, vector<16x32xf32>
      %c0_30 = arith.constant 0 : index
      %c0_31 = arith.constant 0 : index
      %51 = vector.load %arg4[%c0_30, %c0_31] : memref<16x16xf32, #tpu.memory_space<vmem>>, vector<16x16xf32>
      %c0_32 = arith.constant 0 : index
      %c0_33 = arith.constant 0 : index
      %52 = vector.load %arg5[%c0_32, %c0_33] : memref<16x16xf32, #tpu.memory_space<vmem>>, vector<16x16xf32>
      %c0_34 = arith.constant 0 : index
      %c0_35 = arith.constant 0 : index
      %c0_36 = arith.constant 0 : index
      %53 = vector.load %arg10[%c0_34, %c0_35, %c0_36] : memref<3x16x16xf32, #tpu.memory_space<vmem>>, vector<1x16x16xf32>
      %54 = vector.shape_cast %53 : vector<1x16x16xf32> to vector<16x16xf32>
      %c1 = arith.constant 1 : index
      %c0_37 = arith.constant 0 : index
      %c0_38 = arith.constant 0 : index
      %55 = vector.load %arg10[%c1, %c0_37, %c0_38] : memref<3x16x16xf32, #tpu.memory_space<vmem>>, vector<1x16x16xf32>
      %56 = vector.shape_cast %55 : vector<1x16x16xf32> to vector<16x16xf32>
      %c2 = arith.constant 2 : index
      %c0_39 = arith.constant 0 : index
      %c0_40 = arith.constant 0 : index
      %57 = vector.load %arg10[%c2, %c0_39, %c0_40] : memref<3x16x16xf32, #tpu.memory_space<vmem>>, vector<1x16x16xf32>
      %58 = vector.shape_cast %57 : vector<1x16x16xf32> to vector<16x16xf32>
      %c0_41 = arith.constant 0 : index
      %c0_42 = arith.constant 0 : index
      %59 = vector.load %arg12[%c0_41, %c0_42] : memref<1x16xf32, #tpu.memory_space<vmem>>, vector<1x16xf32>
      %c0_43 = arith.constant 0 : index
      %60 = memref.load %arg13[%c0_43] : memref<7xf32, #tpu.memory_space<smem>>
      %c1_44 = arith.constant 1 : index
      %61 = memref.load %arg13[%c1_44] : memref<7xf32, #tpu.memory_space<smem>>
      %c2_45 = arith.constant 2 : index
      %62 = memref.load %arg13[%c2_45] : memref<7xf32, #tpu.memory_space<smem>>
      %cst_46 = arith.constant dense<0.000000e+00> : vector<16xf32>
      %63 = vector.multi_reduction <add>, %47, %cst_46 [0] : vector<16x16xf32> to vector<16xf32>
      %64 = vector.shape_cast %63 : vector<16xf32> to vector<1x16xf32>
      %cst_47 = arith.constant 6.250000e-02 : f32
      %65 = vector.broadcast %cst_47 : f32 to vector<1x16xf32>
      %66 = arith.mulf %64, %65 : vector<1x16xf32>
      %cst_48 = arith.constant dense<0.000000e+00> : vector<1x16xf32>
      %67 = tpu.matmul %66, %54, %cst_48 {dimension_numbers = #tpu.dot_dimension_numbers<[1], [0], [0], [1], [0, 0, 1, 1], [], []>} : vector<1x16xf32>, vector<16x16xf32>, vector<1x16xf32> -> vector<1x16xf32>
      %68 = vector.broadcast %67 : vector<1x16xf32> to vector<16x16xf32>
      %69 = arith.mulf %47, %68 : vector<16x16xf32>
      %cst_49 = arith.constant dense<0.000000e+00> : vector<16xf32>
      %70 = vector.multi_reduction <add>, %69, %cst_49 [1] : vector<16x16xf32> to vector<16xf32>
      %71 = vector.shape_cast %70 : vector<16xf32> to vector<16x1xf32>
      %72 = vector.broadcast %60 : f32 to vector<16x1xf32>
      %73 = arith.addf %71, %72 : vector<16x1xf32>
      %74 = vector.broadcast %67 : vector<1x16xf32> to vector<16x16xf32>
      %75 = arith.mulf %48, %74 : vector<16x16xf32>
      %cst_50 = arith.constant dense<0.000000e+00> : vector<16xf32>
      %76 = vector.multi_reduction <add>, %75, %cst_50 [1] : vector<16x16xf32> to vector<16xf32>
      %77 = vector.shape_cast %76 : vector<16xf32> to vector<16x1xf32>
      %78 = vector.broadcast %60 : f32 to vector<16x1xf32>
      %79 = arith.addf %77, %78 : vector<16x1xf32>
      %c0_51 = arith.constant 0 : index
      %c0_52 = arith.constant 0 : index
      %80 = vector.load %arg11[%c0_51, %c0_52] : memref<16x32xf32, #tpu.memory_space<vmem>>, vector<16x32xf32>
      %cst_53 = arith.constant dense<0.000000e+00> : vector<16x32xf32>
      %81 = tpu.matmul %47, %80, %cst_53 {dimension_numbers = #tpu.dot_dimension_numbers<[1], [0], [0], [1], [0, 0, 1, 1], [], []>} : vector<16x16xf32>, vector<16x32xf32>, vector<16x32xf32> -> vector<16x32xf32>
      %82 = arith.mulf %81, %49 : vector<16x32xf32>
      %cst_54 = arith.constant dense<0.000000e+00> : vector<16xf32>
      %83 = vector.multi_reduction <add>, %82, %cst_54 [1] : vector<16x32xf32> to vector<16xf32>
      %84 = vector.shape_cast %83 : vector<16xf32> to vector<16x1xf32>
      %85 = vector.broadcast %61 : f32 to vector<16x1xf32>
      %86 = arith.addf %84, %85 : vector<16x1xf32>
      %87 = arith.mulf %81, %50 : vector<16x32xf32>
      %cst_55 = arith.constant dense<0.000000e+00> : vector<16xf32>
      %88 = vector.multi_reduction <add>, %87, %cst_55 [1] : vector<16x32xf32> to vector<16xf32>
      %89 = vector.shape_cast %88 : vector<16xf32> to vector<16x1xf32>
      %90 = vector.broadcast %61 : f32 to vector<16x1xf32>
      %91 = arith.addf %89, %90 : vector<16x1xf32>
      %cst_56 = arith.constant dense<0.000000e+00> : vector<1x16xf32>
      %92 = tpu.matmul %66, %58, %cst_56 {dimension_numbers = #tpu.dot_dimension_numbers<[1], [0], [0], [1], [0, 0, 1, 1], [], []>} : vector<1x16xf32>, vector<16x16xf32>, vector<1x16xf32> -> vector<1x16xf32>
      %93 = arith.addf %92, %59 : vector<1x16xf32>
      %94 = vector.broadcast %93 : vector<1x16xf32> to vector<16x16xf32>
      %95 = arith.addf %94, %51 : vector<16x16xf32>
      %96 = math.tanh %95 : vector<16x16xf32>
      %97 = vector.broadcast %93 : vector<1x16xf32> to vector<16x16xf32>
      %98 = arith.addf %97, %52 : vector<16x16xf32>
      %99 = math.tanh %98 : vector<16x16xf32>
      %cst_57 = arith.constant dense<0.000000e+00> : vector<16x16xf32>
      %100 = tpu.matmul %47, %56, %cst_57 {dimension_numbers = #tpu.dot_dimension_numbers<[1], [0], [0], [1], [0, 0, 1, 1], [], []>} : vector<16x16xf32>, vector<16x16xf32>, vector<16x16xf32> -> vector<16x16xf32>
      %101 = arith.mulf %100, %96 : vector<16x16xf32>
      %cst_58 = arith.constant dense<0.000000e+00> : vector<16xf32>
      %102 = vector.multi_reduction <add>, %101, %cst_58 [1] : vector<16x16xf32> to vector<16xf32>
      %103 = vector.shape_cast %102 : vector<16xf32> to vector<16x1xf32>
      %104 = vector.broadcast %62 : f32 to vector<16x1xf32>
      %105 = arith.addf %103, %104 : vector<16x1xf32>
      %cst_59 = arith.constant dense<0.000000e+00> : vector<16x16xf32>
      %106 = tpu.matmul %48, %56, %cst_59 {dimension_numbers = #tpu.dot_dimension_numbers<[1], [0], [0], [1], [0, 0, 1, 1], [], []>} : vector<16x16xf32>, vector<16x16xf32>, vector<16x16xf32> -> vector<16x16xf32>
      %107 = arith.mulf %106, %99 : vector<16x16xf32>
      %cst_60 = arith.constant dense<0.000000e+00> : vector<16xf32>
      %108 = vector.multi_reduction <add>, %107, %cst_60 [1] : vector<16x16xf32> to vector<16xf32>
      %109 = vector.shape_cast %108 : vector<16xf32> to vector<16x1xf32>
      %110 = vector.broadcast %62 : f32 to vector<16x1xf32>
      %111 = arith.addf %109, %110 : vector<16x1xf32>
      %cst_61 = arith.constant 0.000000e+00 : f32
      %112 = vector.broadcast %cst_61 : f32 to vector<16x122xf32>
      %113 = tpu.concatenate %73, %79, %86, %91, %105, %111, %112 in 1 : vector<16x1xf32>, vector<16x1xf32>, vector<16x1xf32>, vector<16x1xf32>, vector<16x1xf32>, vector<16x1xf32>, vector<16x122xf32> -> vector<16x128xf32>
      %c0_62 = arith.constant 0 : index
      %c0_63 = arith.constant 0 : index
      %c0_64 = arith.constant 0 : index
      %114 = vector.load %arg14[%c0_62, %c0_63, %c0_64] : memref<1x16x128xf32, #tpu.memory_space<vmem>>, vector<1x16x128xf32>
      %115 = vector.shape_cast %114 : vector<1x16x128xf32> to vector<16x128xf32>
      %116 = vector.shape_cast %113 : vector<16x128xf32> to vector<1x16x128xf32>
      tpu.vector_store %arg14[%c0_62, %c0_63, %c0_64], %116 {strides = array<i32>} : memref<1x16x128xf32, #tpu.memory_space<vmem>>, vector<1x16x128xf32>,
    } else {
    }
    %c1_i32 = arith.constant 1 : i32
    %24 = arith.cmpi eq, %arg0, %c1_i32 : i32
    %c0_i32_16 = arith.constant 0 : i32
    %25 = arith.cmpi eq, %arg1, %c0_i32_16 : i32
    %26 = arith.andi %24, %25 : i1
    %27 = arith.extui %26 : i1 to i32
    %c0_i32_17 = arith.constant 0 : i32
    %28 = arith.cmpi ne, %27, %c0_i32_17 : i32
    scf.if %28 {
      %c0_18 = arith.constant 0 : index
      %c0_19 = arith.constant 0 : index
      %c0_20 = arith.constant 0 : index
      %29 = vector.load %arg9[%c0_18, %c0_19, %c0_20] : memref<2x16x1xf32, #tpu.memory_space<vmem>>, vector<1x16x1xf32>
      %30 = vector.shape_cast %29 : vector<1x16x1xf32> to vector<16x1xf32>
      %cst_21 = arith.constant 0.000000e+00 : f32
      %31 = vector.broadcast %cst_21 : f32 to vector<16x1xf32>
      %32 = tpu.concatenate %30, %31 in 1 : vector<16x1xf32>, vector<16x1xf32> -> vector<16x2xf32>
      %33 = tpu.concatenate %31, %30 in 1 : vector<16x1xf32>, vector<16x1xf32> -> vector<16x2xf32>
      %34 = tpu.concatenate %32, %33 in 0 : vector<16x2xf32>, vector<16x2xf32> -> vector<32x2xf32>
      %c5 = arith.constant 5 : index
      %35 = memref.load %arg13[%c5] : memref<7xf32, #tpu.memory_space<smem>>
      %c0_22 = arith.constant 0 : index
      %c0_23 = arith.constant 0 : index
      %c0_24 = arith.constant 0 : index
      %36 = vector.load %arg17[%c0_22, %c0_23, %c0_24] : memref<2x16x32xf32, #tpu.memory_space<vmem>>, vector<1x16x32xf32>
      %37 = vector.shape_cast %36 : vector<1x16x32xf32> to vector<16x32xf32>
      %cst_25 = arith.constant dense<0.000000e+00> : vector<16x2xf32>
      %38 = tpu.matmul %37, %34, %cst_25 {dimension_numbers = #tpu.dot_dimension_numbers<[1], [0], [0], [1], [0, 0, 1, 1], [], []>} : vector<16x32xf32>, vector<32x2xf32>, vector<16x2xf32> -> vector<16x2xf32>
      %39 = vector.broadcast %35 : f32 to vector<16x2xf32>
      %40 = arith.addf %38, %39 : vector<16x2xf32>
      %41 = math.tanh %40 : vector<16x2xf32>
      %c1 = arith.constant 1 : index
      %c0_26 = arith.constant 0 : index
      %c0_27 = arith.constant 0 : index
      %42 = vector.load %arg9[%c1, %c0_26, %c0_27] : memref<2x16x1xf32, #tpu.memory_space<vmem>>, vector<1x16x1xf32>
      %43 = vector.shape_cast %42 : vector<1x16x1xf32> to vector<16x1xf32>
      %cst_28 = arith.constant 0.000000e+00 : f32
      %44 = vector.broadcast %cst_28 : f32 to vector<16x1xf32>
      %45 = tpu.concatenate %43, %44 in 1 : vector<16x1xf32>, vector<16x1xf32> -> vector<16x2xf32>
      %46 = tpu.concatenate %44, %43 in 1 : vector<16x1xf32>, vector<16x1xf32> -> vector<16x2xf32>
      %47 = tpu.concatenate %45, %46 in 0 : vector<16x2xf32>, vector<16x2xf32> -> vector<32x2xf32>
      %c6 = arith.constant 6 : index
      %48 = memref.load %arg13[%c6] : memref<7xf32, #tpu.memory_space<smem>>
      %c1_29 = arith.constant 1 : index
      %c0_30 = arith.constant 0 : index
      %c0_31 = arith.constant 0 : index
      %49 = vector.load %arg17[%c1_29, %c0_30, %c0_31] : memref<2x16x32xf32, #tpu.memory_space<vmem>>, vector<1x16x32xf32>
      %50 = vector.shape_cast %49 : vector<1x16x32xf32> to vector<16x32xf32>
      %cst_32 = arith.constant dense<0.000000e+00> : vector<16x2xf32>
      %51 = tpu.matmul %50, %47, %cst_32 {dimension_numbers = #tpu.dot_dimension_numbers<[1], [0], [0], [1], [0, 0, 1, 1], [], []>} : vector<16x32xf32>, vector<32x2xf32>, vector<16x2xf32> -> vector<16x2xf32>
      %52 = vector.broadcast %48 : f32 to vector<16x2xf32>
      %53 = arith.addf %51, %52 : vector<16x2xf32>
      %54 = math.tanh %53 : vector<16x2xf32>
      %55 = arith.maximumf %41, %54 : vector<16x2xf32>
      %56 = arith.subf %41, %55 : vector<16x2xf32>
      %57 = math.exp %56 : vector<16x2xf32>
      %58 = arith.subf %54, %55 : vector<16x2xf32>
      %59 = math.exp %58 : vector<16x2xf32>
      %60 = arith.addf %57, %59 : vector<16x2xf32>
      %61 = tpu.reciprocal %60 {approx = true} : vector<16x2xf32> -> vector<16x2xf32>
      %62 = arith.mulf %57, %61 : vector<16x2xf32>
      %63 = vector.extract_strided_slice %62 {offsets = [0, 0], sizes = [16, 1], strides = [1, 1]} : vector<16x2xf32> to vector<16x1xf32>
      %c0_33 = arith.constant 0 : index
      %c0_34 = arith.constant 0 : index
      %c0_35 = arith.constant 0 : index
      %64 = vector.load %arg17[%c0_33, %c0_34, %c0_35] : memref<2x16x32xf32, #tpu.memory_space<vmem>>, vector<1x16x32xf32>
      %65 = vector.shape_cast %64 : vector<1x16x32xf32> to vector<16x32xf32>
      %66 = vector.extract_strided_slice %65 {offsets = [0, 0], sizes = [16, 16], strides = [1, 1]} : vector<16x32xf32> to vector<16x16xf32>
      %67 = vector.broadcast %63 : vector<16x1xf32> to vector<16x16xf32>
      %68 = arith.mulf %67, %66 : vector<16x16xf32>
      %69 = vector.extract_strided_slice %62 {offsets = [0, 1], sizes = [16, 1], strides = [1, 1]} : vector<16x2xf32> to vector<16x1xf32>
      %c0_36 = arith.constant 0 : index
      %c0_37 = arith.constant 0 : index
      %c0_38 = arith.constant 0 : index
      %70 = vector.load %arg17[%c0_36, %c0_37, %c0_38] : memref<2x16x32xf32, #tpu.memory_space<vmem>>, vector<1x16x32xf32>
      %71 = vector.shape_cast %70 : vector<1x16x32xf32> to vector<16x32xf32>
      %72 = vector.extract_strided_slice %71 {offsets = [0, 16], sizes = [16, 16], strides = [1, 1]} : vector<16x32xf32> to vector<16x16xf32>
      %73 = vector.broadcast %69 : vector<16x1xf32> to vector<16x16xf32>
      %74 = arith.mulf %73, %72 : vector<16x16xf32>
      %75 = arith.mulf %59, %61 : vector<16x2xf32>
      %76 = vector.extract_strided_slice %75 {offsets = [0, 0], sizes = [16, 1], strides = [1, 1]} : vector<16x2xf32> to vector<16x1xf32>
      %c1_39 = arith.constant 1 : index
      %c0_40 = arith.constant 0 : index
      %c0_41 = arith.constant 0 : index
      %77 = vector.load %arg17[%c1_39, %c0_40, %c0_41] : memref<2x16x32xf32, #tpu.memory_space<vmem>>, vector<1x16x32xf32>
      %78 = vector.shape_cast %77 : vector<1x16x32xf32> to vector<16x32xf32>
      %79 = vector.extract_strided_slice %78 {offsets = [0, 0], sizes = [16, 16], strides = [1, 1]} : vector<16x32xf32> to vector<16x16xf32>
      %80 = vector.broadcast %76 : vector<16x1xf32> to vector<16x16xf32>
      %81 = arith.mulf %80, %79 : vector<16x16xf32>
      %82 = arith.addf %68, %81 : vector<16x16xf32>
      %83 = vector.extract_strided_slice %75 {offsets = [0, 1], sizes = [16, 1], strides = [1, 1]} : vector<16x2xf32> to vector<16x1xf32>
      %c1_42 = arith.constant 1 : index
      %c0_43 = arith.constant 0 : index
      %c0_44 = arith.constant 0 : index
      %84 = vector.load %arg17[%c1_42, %c0_43, %c0_44] : memref<2x16x32xf32, #tpu.memory_space<vmem>>, vector<1x16x32xf32>
      %85 = vector.shape_cast %84 : vector<1x16x32xf32> to vector<16x32xf32>
      %86 = vector.extract_strided_slice %85 {offsets = [0, 16], sizes = [16, 16], strides = [1, 1]} : vector<16x32xf32> to vector<16x16xf32>
      %87 = vector.broadcast %83 : vector<16x1xf32> to vector<16x16xf32>
      %88 = arith.mulf %87, %86 : vector<16x16xf32>
      %89 = arith.addf %74, %88 : vector<16x16xf32>
      %c0_45 = arith.constant 0 : index
      %c0_46 = arith.constant 0 : index
      %90 = vector.load %arg2[%c0_45, %c0_46] : memref<16x32xf32, #tpu.memory_space<vmem>>, vector<16x32xf32>
      %c0_47 = arith.constant 0 : index
      %c0_48 = arith.constant 0 : index
      %91 = vector.load %arg3[%c0_47, %c0_48] : memref<16x32xf32, #tpu.memory_space<vmem>>, vector<16x32xf32>
      %c0_49 = arith.constant 0 : index
      %c0_50 = arith.constant 0 : index
      %92 = vector.load %arg4[%c0_49, %c0_50] : memref<16x16xf32, #tpu.memory_space<vmem>>, vector<16x16xf32>
      %c0_51 = arith.constant 0 : index
      %c0_52 = arith.constant 0 : index
      %93 = vector.load %arg5[%c0_51, %c0_52] : memref<16x16xf32, #tpu.memory_space<vmem>>, vector<16x16xf32>
      %c0_53 = arith.constant 0 : index
      %c0_54 = arith.constant 0 : index
      %c0_55 = arith.constant 0 : index
      %94 = vector.load %arg10[%c0_53, %c0_54, %c0_55] : memref<3x16x16xf32, #tpu.memory_space<vmem>>, vector<1x16x16xf32>
      %95 = vector.shape_cast %94 : vector<1x16x16xf32> to vector<16x16xf32>
      %c1_56 = arith.constant 1 : index
      %c0_57 = arith.constant 0 : index
      %c0_58 = arith.constant 0 : index
      %96 = vector.load %arg10[%c1_56, %c0_57, %c0_58] : memref<3x16x16xf32, #tpu.memory_space<vmem>>, vector<1x16x16xf32>
      %97 = vector.shape_cast %96 : vector<1x16x16xf32> to vector<16x16xf32>
      %c2 = arith.constant 2 : index
      %c0_59 = arith.constant 0 : index
      %c0_60 = arith.constant 0 : index
      %98 = vector.load %arg10[%c2, %c0_59, %c0_60] : memref<3x16x16xf32, #tpu.memory_space<vmem>>, vector<1x16x16xf32>
      %99 = vector.shape_cast %98 : vector<1x16x16xf32> to vector<16x16xf32>
      %c0_61 = arith.constant 0 : index
      %c0_62 = arith.constant 0 : index
      %100 = vector.load %arg12[%c0_61, %c0_62] : memref<1x16xf32, #tpu.memory_space<vmem>>, vector<1x16xf32>
      %c0_63 = arith.constant 0 : index
      %101 = memref.load %arg13[%c0_63] : memref<7xf32, #tpu.memory_space<smem>>
      %c1_64 = arith.constant 1 : index
      %102 = memref.load %arg13[%c1_64] : memref<7xf32, #tpu.memory_space<smem>>
      %c2_65 = arith.constant 2 : index
      %103 = memref.load %arg13[%c2_65] : memref<7xf32, #tpu.memory_space<smem>>
      %cst_66 = arith.constant dense<0.000000e+00> : vector<16xf32>
      %104 = vector.multi_reduction <add>, %82, %cst_66 [0] : vector<16x16xf32> to vector<16xf32>
      %105 = vector.shape_cast %104 : vector<16xf32> to vector<1x16xf32>
      %cst_67 = arith.constant 6.250000e-02 : f32
      %106 = vector.broadcast %cst_67 : f32 to vector<1x16xf32>
      %107 = arith.mulf %105, %106 : vector<1x16xf32>
      %cst_68 = arith.constant dense<0.000000e+00> : vector<1x16xf32>
      %108 = tpu.matmul %107, %95, %cst_68 {dimension_numbers = #tpu.dot_dimension_numbers<[1], [0], [0], [1], [0, 0, 1, 1], [], []>} : vector<1x16xf32>, vector<16x16xf32>, vector<1x16xf32> -> vector<1x16xf32>
      %109 = vector.broadcast %108 : vector<1x16xf32> to vector<16x16xf32>
      %110 = arith.mulf %82, %109 : vector<16x16xf32>
      %cst_69 = arith.constant dense<0.000000e+00> : vector<16xf32>
      %111 = vector.multi_reduction <add>, %110, %cst_69 [1] : vector<16x16xf32> to vector<16xf32>
      %112 = vector.shape_cast %111 : vector<16xf32> to vector<16x1xf32>
      %113 = vector.broadcast %101 : f32 to vector<16x1xf32>
      %114 = arith.addf %112, %113 : vector<16x1xf32>
      %115 = vector.broadcast %108 : vector<1x16xf32> to vector<16x16xf32>
      %116 = arith.mulf %89, %115 : vector<16x16xf32>
      %cst_70 = arith.constant dense<0.000000e+00> : vector<16xf32>
      %117 = vector.multi_reduction <add>, %116, %cst_70 [1] : vector<16x16xf32> to vector<16xf32>
      %118 = vector.shape_cast %117 : vector<16xf32> to vector<16x1xf32>
      %119 = vector.broadcast %101 : f32 to vector<16x1xf32>
      %120 = arith.addf %118, %119 : vector<16x1xf32>
      %c0_71 = arith.constant 0 : index
      %c0_72 = arith.constant 0 : index
      %121 = vector.load %arg11[%c0_71, %c0_72] : memref<16x32xf32, #tpu.memory_space<vmem>>, vector<16x32xf32>
      %cst_73 = arith.constant dense<0.000000e+00> : vector<16x32xf32>
      %122 = tpu.matmul %82, %121, %cst_73 {dimension_numbers = #tpu.dot_dimension_numbers<[1], [0], [0], [1], [0, 0, 1, 1], [], []>} : vector<16x16xf32>, vector<16x32xf32>, vector<16x32xf32> -> vector<16x32xf32>
      %123 = arith.mulf %122, %90 : vector<16x32xf32>
      %cst_74 = arith.constant dense<0.000000e+00> : vector<16xf32>
      %124 = vector.multi_reduction <add>, %123, %cst_74 [1] : vector<16x32xf32> to vector<16xf32>
      %125 = vector.shape_cast %124 : vector<16xf32> to vector<16x1xf32>
      %126 = vector.broadcast %102 : f32 to vector<16x1xf32>
      %127 = arith.addf %125, %126 : vector<16x1xf32>
      %128 = arith.mulf %122, %91 : vector<16x32xf32>
      %cst_75 = arith.constant dense<0.000000e+00> : vector<16xf32>
      %129 = vector.multi_reduction <add>, %128, %cst_75 [1] : vector<16x32xf32> to vector<16xf32>
      %130 = vector.shape_cast %129 : vector<16xf32> to vector<16x1xf32>
      %131 = vector.broadcast %102 : f32 to vector<16x1xf32>
      %132 = arith.addf %130, %131 : vector<16x1xf32>
      %cst_76 = arith.constant dense<0.000000e+00> : vector<1x16xf32>
      %133 = tpu.matmul %107, %99, %cst_76 {dimension_numbers = #tpu.dot_dimension_numbers<[1], [0], [0], [1], [0, 0, 1, 1], [], []>} : vector<1x16xf32>, vector<16x16xf32>, vector<1x16xf32> -> vector<1x16xf32>
      %134 = arith.addf %133, %100 : vector<1x16xf32>
      %135 = vector.broadcast %134 : vector<1x16xf32> to vector<16x16xf32>
      %136 = arith.addf %135, %92 : vector<16x16xf32>
      %137 = math.tanh %136 : vector<16x16xf32>
      %138 = vector.broadcast %134 : vector<1x16xf32> to vector<16x16xf32>
      %139 = arith.addf %138, %93 : vector<16x16xf32>
      %140 = math.tanh %139 : vector<16x16xf32>
      %cst_77 = arith.constant dense<0.000000e+00> : vector<16x16xf32>
      %141 = tpu.matmul %82, %97, %cst_77 {dimension_numbers = #tpu.dot_dimension_numbers<[1], [0], [0], [1], [0, 0, 1, 1], [], []>} : vector<16x16xf32>, vector<16x16xf32>, vector<16x16xf32> -> vector<16x16xf32>
      %142 = arith.mulf %141, %137 : vector<16x16xf32>
      %cst_78 = arith.constant dense<0.000000e+00> : vector<16xf32>
      %143 = vector.multi_reduction <add>, %142, %cst_78 [1] : vector<16x16xf32> to vector<16xf32>
      %144 = vector.shape_cast %143 : vector<16xf32> to vector<16x1xf32>
      %145 = vector.broadcast %103 : f32 to vector<16x1xf32>
      %146 = arith.addf %144, %145 : vector<16x1xf32>
      %cst_79 = arith.constant dense<0.000000e+00> : vector<16x16xf32>
      %147 = tpu.matmul %89, %97, %cst_79 {dimension_numbers = #tpu.dot_dimension_numbers<[1], [0], [0], [1], [0, 0, 1, 1], [], []>} : vector<16x16xf32>, vector<16x16xf32>, vector<16x16xf32> -> vector<16x16xf32>
      %148 = arith.mulf %147, %140 : vector<16x16xf32>
      %cst_80 = arith.constant dense<0.000000e+00> : vector<16xf32>
      %149 = vector.multi_reduction <add>, %148, %cst_80 [1] : vector<16x16xf32> to vector<16xf32>
      %150 = vector.shape_cast %149 : vector<16xf32> to vector<16x1xf32>
      %151 = vector.broadcast %103 : f32 to vector<16x1xf32>
      %152 = arith.addf %150, %151 : vector<16x1xf32>
      %cst_81 = arith.constant 0.000000e+00 : f32
      %153 = vector.broadcast %cst_81 : f32 to vector<16x122xf32>
      %154 = tpu.concatenate %114, %120, %127, %132, %146, %152, %153 in 1 : vector<16x1xf32>, vector<16x1xf32>, vector<16x1xf32>, vector<16x1xf32>, vector<16x1xf32>, vector<16x1xf32>, vector<16x122xf32> -> vector<16x128xf32>
      %c0_82 = arith.constant 0 : index
      %c0_83 = arith.constant 0 : index
      %155 = vector.load %arg15[%c0_82, %c0_83] : memref<16x128xf32, #tpu.memory_space<vmem>>, vector<16x128xf32>
      tpu.vector_store %arg15[%c0_82, %c0_83], %154 {strides = array<i32>} : memref<16x128xf32, #tpu.memory_space<vmem>>, vector<16x128xf32>,
    } else {
    }
    return
  }
  func.func @transform_0(%arg0: i32, %arg1: i32) -> (i32, i32) {
    %c0_i32 = arith.constant 0 : i32
    %c0_i32_0 = arith.constant 0 : i32
    %c0_i32_1 = arith.constant 0 : i32
    return %c0_i32, %c0_i32_0 : i32, i32
  }
  func.func @transform_1(%arg0: i32, %arg1: i32) -> (i32, i32) {
    %c0_i32 = arith.constant 0 : i32
    %c0_i32_0 = arith.constant 0 : i32
    %c0_i32_1 = arith.constant 0 : i32
    return %c0_i32, %c0_i32_0 : i32, i32
  }
  func.func @transform_2(%arg0: i32, %arg1: i32) -> (i32, i32) {
    %c0_i32 = arith.constant 0 : i32
    %c0_i32_0 = arith.constant 0 : i32
    %c0_i32_1 = arith.constant 0 : i32
    return %c0_i32, %c0_i32_0 : i32, i32
  }
  func.func @transform_3(%arg0: i32, %arg1: i32) -> (i32, i32) {
    %c0_i32 = arith.constant 0 : i32
    %c0_i32_0 = arith.constant 0 : i32
    %c0_i32_1 = arith.constant 0 : i32
    return %c0_i32, %c0_i32_0 : i32, i32
  }
  func.func @transform_4(%arg0: i32, %arg1: i32) -> (i32, i32, i32) {
    %c0_i32 = arith.constant 0 : i32
    %c0_i32_0 = arith.constant 0 : i32
    return %arg0, %c0_i32, %arg1 : i32, i32, i32
  }
  func.func @transform_5(%arg0: i32, %arg1: i32) -> (i32, i32, i32) {
    %c0_i32 = arith.constant 0 : i32
    %c0_i32_0 = arith.constant 0 : i32
    %c0_i32_1 = arith.constant 0 : i32
    return %arg0, %c0_i32, %c0_i32_0 : i32, i32, i32
  }
  func.func @transform_6(%arg0: i32, %arg1: i32) -> (i32, i32, i32) {
    %c0_i32 = arith.constant 0 : i32
    %c0_i32_0 = arith.constant 0 : i32
    %c0_i32_1 = arith.constant 0 : i32
    return %arg0, %c0_i32, %c0_i32_0 : i32, i32, i32
  }
  func.func @transform_7(%arg0: i32, %arg1: i32) -> (i32, i32, i32) {
    %c0_i32 = arith.constant 0 : i32
    %c0_i32_0 = arith.constant 0 : i32
    %c0_i32_1 = arith.constant 0 : i32
    %c0_i32_2 = arith.constant 0 : i32
    return %c0_i32, %c0_i32_0, %c0_i32_1 : i32, i32, i32
  }
  func.func @transform_8(%arg0: i32, %arg1: i32) -> (i32, i32, i32) {
    %c0_i32 = arith.constant 0 : i32
    %c0_i32_0 = arith.constant 0 : i32
    %c0_i32_1 = arith.constant 0 : i32
    %c0_i32_2 = arith.constant 0 : i32
    return %c0_i32, %c0_i32_0, %c0_i32_1 : i32, i32, i32
  }
  func.func @transform_9(%arg0: i32, %arg1: i32) -> (i32, i32) {
    %c0_i32 = arith.constant 0 : i32
    %c0_i32_0 = arith.constant 0 : i32
    %c0_i32_1 = arith.constant 0 : i32
    return %c0_i32, %c0_i32_0 : i32, i32
  }
  func.func @transform_10(%arg0: i32, %arg1: i32) -> (i32, i32) {
    %c0_i32 = arith.constant 0 : i32
    %c0_i32_0 = arith.constant 0 : i32
    %c0_i32_1 = arith.constant 0 : i32
    return %c0_i32, %c0_i32_0 : i32, i32
  }
  func.func @transform_11(%arg0: i32, %arg1: i32) -> i32 {
    %c0_i32 = arith.constant 0 : i32
    %c0_i32_0 = arith.constant 0 : i32
    return %c0_i32 : i32
  }
  func.func @transform_12(%arg0: i32, %arg1: i32) -> (i32, i32, i32) {
    %c0_i32 = arith.constant 0 : i32
    %c0_i32_0 = arith.constant 0 : i32
    %c0_i32_1 = arith.constant 0 : i32
    return %arg0, %c0_i32, %c0_i32_0 : i32, i32, i32
  }
  func.func @transform_13(%arg0: i32, %arg1: i32) -> (i32, i32) {
    %c0_i32 = arith.constant 0 : i32
    %c0_i32_0 = arith.constant 0 : i32
    %c0_i32_1 = arith.constant 0 : i32
    return %c0_i32, %c0_i32_0 : i32, i32
  }
}

</mosaic_0001>

<llo_original>
// kernel: modeler_forward.1
$region0: #{modeler_forward.1}
  #allocation0 [shape = 'u32[]', space=smem, size = 0x4, offset = 0x4, fixed_abs, tag = 'smem constant byte address 0x4 - core index']
  #allocation1 [shape = 'u32[72,128]{1,0:T(1,128)}', space=vmem, size = 0x9000, scoped, tag = 'internal scratch']
  #allocation2 [shape = 'f32[16,32]{1,0:T(8,128)}', space=vmem, size = 0x2000, scoped, tag = 'scratch operand']
  #allocation3 [shape = 'f32[2,16,32]{2,1,0:T(8,128)}', space=vmem, size = 0x4000, scoped, tag = 'scratch operand']
  %s0 = inlined_call_operand.vmem [shape: f32[16,32], index: 0, kind: input, shape index: {}]
  %s1 = inlined_call_operand.vmem [shape: f32[16,32], index: 1, kind: input, shape index: {}]
  %s2 = inlined_call_operand.vmem [shape: f32[16,16], index: 2, kind: input, shape index: {}]
  %s3 = inlined_call_operand.vmem [shape: f32[16,16], index: 3, kind: input, shape index: {}]
  %s4 = inlined_call_operand.vmem [shape: bf16[2,16,16], index: 4, kind: input, shape index: {}]
  %s5 = inlined_call_operand.vmem [shape: f32[2,32,16], index: 5, kind: input, shape index: {}]
  %s6 = inlined_call_operand.vmem [shape: f32[2,1,16], index: 6, kind: input, shape index: {}]
  %s7 = inlined_call_operand.vmem [shape: f32[2,16,1], index: 7, kind: input, shape index: {}]
  %s8 = inlined_call_operand.vmem [shape: f32[3,16,16], index: 8, kind: input, shape index: {}]
  %s9 = inlined_call_operand.vmem [shape: f32[16,32], index: 9, kind: input, shape index: {}]
  %s10 = inlined_call_operand.vmem [shape: f32[1,16], index: 10, kind: input, shape index: {}]
  %s11 = inlined_call_operand.vmem [shape: f32[7], index: 11, kind: input, shape index: {}]
  %s12 = inlined_call_operand.vmem [shape: f32[2,16,128], index: 12, kind: output, shape index: {0}]
  %s13 = inlined_call_operand.vmem [shape: f32[16,128], index: 13, kind: output, shape index: {1}]
  %14 = xla_tuple %s12, %s13
  %s15 = sld [smem:[#allocation0]]
  $region105: #{modeler_forward.1} parent=0
    _
  %s17 = ssub.s32 1, %s15
  %s18 = scalar_select 0, %s17, %s15
  $region1: #{modeler_forward.1} parent=0
    #allocation4 [shape = 'u8[512]{0}', space=smem, size = 0x200, scoped, tag = 'input window, operand 11, single buffered']
    #allocation5 [shape = 's32[2]{0}', space=sflag, size = 0x8, scoped, tag = 'scoped memory for modeler_forward.1']
    %19 = vsyncpa [#allocation5], 0
    loop: start=0, step=1, limit=4
    $region2: #{modeler_forward.1} parent=1 // loop_pre_header
      _
    $region3: #{modeler_forward.1} parent=1 // loop_header
      %s21 = sphi 0, %s25
      %p22 = scmp.ge.s32.totalorder %s21, 4
      %s28 = sphi 0, %s40
      %s29 = sphi 0, %s36
      %s30 = sphi 0, %s28
      %s31 = sphi 0, %s29
      %s32 = sphi 0, %s30
      %s33 = sphi 0, %s31
      %s41 = sphi 0, %s41
      %s43 = sphi 0, %s41
      %s44 = sphi 0, %s43
      %s58 = sphi 0, %s44
      %s62 = sphi 0, %s62
      %s64 = sphi 0, %s62
      %s65 = sphi 0, %s64
      %s79 = sphi 0, %s65
      %s83 = sphi 0, %s83
      %s85 = sphi 0, %s83
      %s86 = sphi 0, %s85
      %s100 = sphi 0, %s86
      %s104 = sphi 0, %s104
      %s106 = sphi 0, %s104
      %s107 = sphi 0, %s106
      %s121 = sphi 0, %s107
      %s129 = sphi 0, %s131
      %s132 = sphi 0, %s129
      %s133 = sphi 0, %s132
      %s149 = sphi 0, %s133
      %s155 = sphi 0, %s157
      %s158 = sphi 0, %s155
      %s159 = sphi 0, %s158
      %s175 = sphi 0, %s159
      %s181 = sphi 0, %s183
      %s184 = sphi 0, %s181
      %s185 = sphi 0, %s184
      %s201 = sphi 0, %s185
      %s205 = sphi 0, %s205
      %s207 = sphi 0, %s205
      %s208 = sphi 0, %s207
      %s222 = sphi 0, %s208
      %s226 = sphi 0, %s226
      %s228 = sphi 0, %s226
      %s229 = sphi 0, %s228
      %s243 = sphi 0, %s229
      %s247 = sphi 0, %s247
      %s249 = sphi 0, %s247
      %s250 = sphi 0, %s249
      %s264 = sphi 0, %s250
      %s268 = sphi 0, %s268
      %s270 = sphi 0, %s268
      %s271 = sphi 0, %s270
      %s285 = sphi 0, %s271
      %s289 = sphi 0, %s289
      %s291 = sphi 0, %s289
      %s292 = sphi 0, %s291
      %s306 = sphi 0, %s292
      %s312 = sphi 0, %s314
      %s315 = sphi 0, %s312
      %s316 = sphi 0, %s315
      %s332 = sphi 0, %s316
      %s336 = sphi 0, %s336
      %s338 = sphi 0, %s336
      %s339 = sphi 0, %s338
      %s353 = sphi 0, %s339
    $region4: #{modeler_forward.1} parent=1 // loop_header_branch
      %24 = sbr.rel (%p22) target = $region8
    $region5: #{modeler_forward.1} parent=1 // loop_body
      %s26 = ssub.s32 %s21, 1
      %s27 = ssub.s32 %s21, 2
      %s34 = sadd.s32 1, %s29
      %p35 = scmp.ge.s32.totalorder %s34, 1
      %s36 = scalar_select %p35, 0, %s34
      %s37 = sadd.s32 1, %s28
      %s38 = scalar_select %p35, %s37, %s28
      %p39 = scmp.ge.s32.totalorder %s38, 2
      %s40 = scalar_select %p39, 0, %s38
      %s42 = sadd.s32 %s41, 1
      %p45 = scmp.eq.s32.totalorder %s21, 1
      %p46 = scmp.ne.s32.totalorder %s41, %s43
      %p47 = scmp.eq.s32.totalorder %s21, 0
      %p48 = por %p46, %p47
      %p49 = scmp.ne.s32.totalorder %s41, %s43
      %p50 = scmp.eq.s32.totalorder %s26, 1
      %p51 = por %p49, %p50
      %p52 = scmp.ne.s32.totalorder %s43, %s44
      %p53 = scmp.eq.s32.totalorder %s26, 0
      %p54 = por %p52, %p53
      %p55 = scmp.ne.s32.totalorder %s43, %s44
      %p56 = scmp.eq.s32.totalorder %s27, 1
      %p57 = por %p55, %p56
      %p59 = scmp.ne.s32.totalorder %s44, %s58
      %p60 = scmp.eq.s32.totalorder %s27, 0
      %p61 = por %p59, %p60
      %s63 = sadd.s32 %s62, 1
      %p66 = scmp.eq.s32.totalorder %s21, 1
      %p67 = scmp.ne.s32.totalorder %s62, %s64
      %p68 = scmp.eq.s32.totalorder %s21, 0
      %p69 = por %p67, %p68
      %p70 = scmp.ne.s32.totalorder %s62, %s64
      %p71 = scmp.eq.s32.totalorder %s26, 1
      %p72 = por %p70, %p71
      %p73 = scmp.ne.s32.totalorder %s64, %s65
      %p74 = scmp.eq.s32.totalorder %s26, 0
      %p75 = por %p73, %p74
      %p76 = scmp.ne.s32.totalorder %s64, %s65
      %p77 = scmp.eq.s32.totalorder %s27, 1
      %p78 = por %p76, %p77
      %p80 = scmp.ne.s32.totalorder %s65, %s79
      %p81 = scmp.eq.s32.totalorder %s27, 0
      %p82 = por %p80, %p81
      %s84 = sadd.s32 %s83, 1
      %p87 = scmp.eq.s32.totalorder %s21, 1
      %p88 = scmp.ne.s32.totalorder %s83, %s85
      %p89 = scmp.eq.s32.totalorder %s21, 0
      %p90 = por %p88, %p89
      %p91 = scmp.ne.s32.totalorder %s83, %s85
      %p92 = scmp.eq.s32.totalorder %s26, 1
      %p93 = por %p91, %p92
      %p94 = scmp.ne.s32.totalorder %s85, %s86
      %p95 = scmp.eq.s32.totalorder %s26, 0
      %p96 = por %p94, %p95
      %p97 = scmp.ne.s32.totalorder %s85, %s86
      %p98 = scmp.eq.s32.totalorder %s27, 1
      %p99 = por %p97, %p98
      %p101 = scmp.ne.s32.totalorder %s86, %s100
      %p102 = scmp.eq.s32.totalorder %s27, 0
      %p103 = por %p101, %p102
      %s105 = sadd.s32 %s104, 1
      %p108 = scmp.eq.s32.totalorder %s21, 1
      %p109 = scmp.ne.s32.totalorder %s104, %s106
      %p110 = scmp.eq.s32.totalorder %s21, 0
      %p111 = por %p109, %p110
      %p112 = scmp.ne.s32.totalorder %s104, %s106
      %p113 = scmp.eq.s32.totalorder %s26, 1
      %p114 = por %p112, %p113
      %p115 = scmp.ne.s32.totalorder %s106, %s107
      %p116 = scmp.eq.s32.totalorder %s26, 0
      %p117 = por %p115, %p116
      %p118 = scmp.ne.s32.totalorder %s106, %s107
      %p119 = scmp.eq.s32.totalorder %s27, 1
      %p120 = por %p118, %p119
      %p122 = scmp.ne.s32.totalorder %s107, %s121
      %p123 = scmp.eq.s32.totalorder %s27, 0
      %p124 = por %p122, %p123
      %s125 = ssub.s32 %s28, %s40
      %s126 = ssub.s32 %s29, %s36
      %s127 = sor.u32 %s125, %s126
      %p128 = scmp.eq.s32.totalorder %s127, 0
      %s130 = sadd.s32 %s129, 1
      %s131 = scalar_select %p128, %s129, %s130
      %p134 = pneg %p128
      %p135 = scmp.eq.s32.totalorder %s21, 1
      %p136 = por %p134, %p135
      %p137 = scmp.ne.s32.totalorder %s129, %s132
      %p138 = scmp.eq.s32.totalorder %s21, 0
      %p139 = por %p137, %p138
      %p140 = scmp.ne.s32.totalorder %s129, %s132
      %p141 = scmp.eq.s32.totalorder %s26, 1
      %p142 = por %p140, %p141
      %p143 = scmp.ne.s32.totalorder %s132, %s133
      %p144 = scmp.eq.s32.totalorder %s26, 0
      %p145 = por %p143, %p144
      %p146 = scmp.ne.s32.totalorder %s132, %s133
      %p147 = scmp.eq.s32.totalorder %s27, 1
      %p148 = por %p146, %p147
      %p150 = scmp.ne.s32.totalorder %s133, %s149
      %p151 = scmp.eq.s32.totalorder %s27, 0
      %p152 = por %p150, %p151
      %s153 = ssub.s32 %s28, %s40
      %p154 = scmp.eq.s32.totalorder %s153, 0
      %s156 = sadd.s32 %s155, 1
      %s157 = scalar_select %p154, %s155, %s156
      %p160 = pneg %p154
      %p161 = scmp.eq.s32.totalorder %s21, 1
      %p162 = por %p160, %p161
      %p163 = scmp.ne.s32.totalorder %s155, %s158
      %p164 = scmp.eq.s32.totalorder %s21, 0
      %p165 = por %p163, %p164
      %p166 = scmp.ne.s32.totalorder %s155, %s158
      %p167 = scmp.eq.s32.totalorder %s26, 1
      %p168 = por %p166, %p167
      %p169 = scmp.ne.s32.totalorder %s158, %s159
      %p170 = scmp.eq.s32.totalorder %s26, 0
      %p171 = por %p169, %p170
      %p172 = scmp.ne.s32.totalorder %s158, %s159
      %p173 = scmp.eq.s32.totalorder %s27, 1
      %p174 = por %p172, %p173
      %p176 = scmp.ne.s32.totalorder %s159, %s175
      %p177 = scmp.eq.s32.totalorder %s27, 0
      %p178 = por %p176, %p177
      %s179 = ssub.s32 %s28, %s40
      %p180 = scmp.eq.s32.totalorder %s179, 0
      %s182 = sadd.s32 %s181, 1
      %s183 = scalar_select %p180, %s181, %s182
      %p186 = pneg %p180
      %p187 = scmp.eq.s32.totalorder %s21, 1
      %p188 = por %p186, %p187
      %p189 = scmp.ne.s32.totalorder %s181, %s184
      %p190 = scmp.eq.s32.totalorder %s21, 0
      %p191 = por %p189, %p190
      %p192 = scmp.ne.s32.totalorder %s181, %s184
      %p193 = scmp.eq.s32.totalorder %s26, 1
      %p194 = por %p192, %p193
      %p195 = scmp.ne.s32.totalorder %s184, %s185
      %p196 = scmp.eq.s32.totalorder %s26, 0
      %p197 = por %p195, %p196
      %p198 = scmp.ne.s32.totalorder %s184, %s185
      %p199 = scmp.eq.s32.totalorder %s27, 1
      %p200 = por %p198, %p199
      %p202 = scmp.ne.s32.totalorder %s185, %s201
      %p203 = scmp.eq.s32.totalorder %s27, 0
      %p204 = por %p202, %p203
      %s206 = sadd.s32 %s205, 1
      %p209 = scmp.eq.s32.totalorder %s21, 1
      %p210 = scmp.ne.s32.totalorder %s205, %s207
      %p211 = scmp.eq.s32.totalorder %s21, 0
      %p212 = por %p210, %p211
      %p213 = scmp.ne.s32.totalorder %s205, %s207
      %p214 = scmp.eq.s32.totalorder %s26, 1
      %p215 = por %p213, %p214
      %p216 = scmp.ne.s32.totalorder %s207, %s208
      %p217 = scmp.eq.s32.totalorder %s26, 0
      %p218 = por %p216, %p217
      %p219 = scmp.ne.s32.totalorder %s207, %s208
      %p220 = scmp.eq.s32.totalorder %s27, 1
      %p221 = por %p219, %p220
      %p223 = scmp.ne.s32.totalorder %s208, %s222
      %p224 = scmp.eq.s32.totalorder %s27, 0
      %p225 = por %p223, %p224
      %s227 = sadd.s32 %s226, 1
      %p230 = scmp.eq.s32.totalorder %s21, 1
      %p231 = scmp.ne.s32.totalorder %s226, %s228
      %p232 = scmp.eq.s32.totalorder %s21, 0
      %p233 = por %p231, %p232
      %p234 = scmp.ne.s32.totalorder %s226, %s228
      %p235 = scmp.eq.s32.totalorder %s26, 1
      %p236 = por %p234, %p235
      %p237 = scmp.ne.s32.totalorder %s228, %s229
      %p238 = scmp.eq.s32.totalorder %s26, 0
      %p239 = por %p237, %p238
      %p240 = scmp.ne.s32.totalorder %s228, %s229
      %p241 = scmp.eq.s32.totalorder %s27, 1
      %p242 = por %p240, %p241
      %p244 = scmp.ne.s32.totalorder %s229, %s243
      %p245 = scmp.eq.s32.totalorder %s27, 0
      %p246 = por %p244, %p245
      %s248 = sadd.s32 %s247, 1
      %p251 = scmp.eq.s32.totalorder %s21, 1
      %p252 = scmp.ne.s32.totalorder %s247, %s249
      %p253 = scmp.eq.s32.totalorder %s21, 0
      %p254 = por %p252, %p253
      %p255 = scmp.ne.s32.totalorder %s247, %s249
      %p256 = scmp.eq.s32.totalorder %s26, 1
      %p257 = por %p255, %p256
      %p258 = scmp.ne.s32.totalorder %s249, %s250
      %p259 = scmp.eq.s32.totalorder %s26, 0
      %p260 = por %p258, %p259
      %p261 = scmp.ne.s32.totalorder %s249, %s250
      %p262 = scmp.eq.s32.totalorder %s27, 1
      %p263 = por %p261, %p262
      %p265 = scmp.ne.s32.totalorder %s250, %s264
      %p266 = scmp.eq.s32.totalorder %s27, 0
      %p267 = por %p265, %p266
      %s269 = sadd.s32 %s268, 1
      %p272 = scmp.eq.s32.totalorder %s21, 1
      %p273 = scmp.ne.s32.totalorder %s268, %s270
      %p274 = scmp.eq.s32.totalorder %s21, 0
      %p275 = por %p273, %p274
      %p276 = scmp.ne.s32.totalorder %s268, %s270
      %p277 = scmp.eq.s32.totalorder %s26, 1
      %p278 = por %p276, %p277
      %p279 = scmp.ne.s32.totalorder %s270, %s271
      %p280 = scmp.eq.s32.totalorder %s26, 0
      %p281 = por %p279, %p280
      %p282 = scmp.ne.s32.totalorder %s270, %s271
      %p283 = scmp.eq.s32.totalorder %s27, 1
      %p284 = por %p282, %p283
      %p286 = scmp.ne.s32.totalorder %s271, %s285
      %p287 = scmp.eq.s32.totalorder %s27, 0
      %p288 = por %p286, %p287
      %s290 = sadd.s32 %s289, 1
      %p293 = scmp.eq.s32.totalorder %s21, 1
      %p294 = scmp.ne.s32.totalorder %s289, %s291
      %p295 = scmp.eq.s32.totalorder %s21, 0
      %p296 = por %p294, %p295
      %p297 = scmp.ne.s32.totalorder %s289, %s291
      %p298 = scmp.eq.s32.totalorder %s26, 1
      %p299 = por %p297, %p298
      %p300 = scmp.ne.s32.totalorder %s291, %s292
      %p301 = scmp.eq.s32.totalorder %s26, 0
      %p302 = por %p300, %p301
      %p303 = scmp.ne.s32.totalorder %s291, %s292
      %p304 = scmp.eq.s32.totalorder %s27, 1
      %p305 = por %p303, %p304
      %p307 = scmp.ne.s32.totalorder %s292, %s306
      %p308 = scmp.eq.s32.totalorder %s27, 0
      %p309 = por %p307, %p308
      %s310 = ssub.s32 %s28, %s40
      %p311 = scmp.eq.s32.totalorder %s310, 0
      %s313 = sadd.s32 %s312, 1
      %s314 = scalar_select %p311, %s312, %s313
      %p317 = pneg %p311
      %p318 = scmp.eq.s32.totalorder %s21, 1
      %p319 = por %p317, %p318
      %p320 = scmp.ne.s32.totalorder %s312, %s315
      %p321 = scmp.eq.s32.totalorder %s21, 0
      %p322 = por %p320, %p321
      %p323 = scmp.ne.s32.totalorder %s312, %s315
      %p324 = scmp.eq.s32.totalorder %s26, 1
      %p325 = por %p323, %p324
      %p326 = scmp.ne.s32.totalorder %s315, %s316
      %p327 = scmp.eq.s32.totalorder %s26, 0
      %p328 = por %p326, %p327
      %p329 = scmp.ne.s32.totalorder %s315, %s316
      %p330 = scmp.eq.s32.totalorder %s27, 1
      %p331 = por %p329, %p330
      %p333 = scmp.ne.s32.totalorder %s316, %s332
      %p334 = scmp.eq.s32.totalorder %s27, 0
      %p335 = por %p333, %p334
      %s337 = sadd.s32 %s336, 1
      %p340 = scmp.eq.s32.totalorder %s21, 1
      %p341 = scmp.ne.s32.totalorder %s336, %s338
      %p342 = scmp.eq.s32.totalorder %s21, 0
      %p343 = por %p341, %p342
      %p344 = scmp.ne.s32.totalorder %s336, %s338
      %p345 = scmp.eq.s32.totalorder %s26, 1
      %p346 = por %p344, %p345
      %p347 = scmp.ne.s32.totalorder %s338, %s339
      %p348 = scmp.eq.s32.totalorder %s26, 0
      %p349 = por %p347, %p348
      %p350 = scmp.ne.s32.totalorder %s338, %s339
      %p351 = scmp.eq.s32.totalorder %s27, 1
      %p352 = por %p350, %p351
      %p354 = scmp.ne.s32.totalorder %s339, %s353
      %p355 = scmp.eq.s32.totalorder %s27, 0
      %p356 = por %p354, %p355
      %p357 = scmp.le.s32.totalorder 1, %s21
      %p358 = scmp.lt.s32.totalorder %s21, 3
      %p359 = pnand %p357, %p358
      %p360 = pneg %p359
      // Predicated region
      $region9: #{modeler_forward.1} parent=5 // pred_check
        _
      $region10: #{modeler_forward.1} parent=5 // pred_check_branch
        %362 = sbr.rel (%p359) target = $region12
      $region11: #{modeler_forward.1} parent=5 // pred_region
        %s363 = ssub.s32 %s21, 1
        // Predicated region
        $region13: #{modeler_forward.1} parent=11 // pred_check
          %p364 = pneg %p54
        $region14: #{modeler_forward.1} parent=11 // pred_check_branch
          %366 = sbr.rel (%p364) target = $region16
        $region15: #{modeler_forward.1} parent=11 // pred_region
          _
        $region16: #{modeler_forward.1} parent=11 // pred_fallthru
          _
        // Predicated region
        $region17: #{modeler_forward.1} parent=11 // pred_check
          %p367 = pneg %p75
        $region18: #{modeler_forward.1} parent=11 // pred_check_branch
          %369 = sbr.rel (%p367) target = $region20
        $region19: #{modeler_forward.1} parent=11 // pred_region
          _
        $region20: #{modeler_forward.1} parent=11 // pred_fallthru
          _
        // Predicated region
        $region21: #{modeler_forward.1} parent=11 // pred_check
          %p370 = pneg %p96
        $region22: #{modeler_forward.1} parent=11 // pred_check_branch
          %372 = sbr.rel (%p370) target = $region24
        $region23: #{modeler_forward.1} parent=11 // pred_region
          _
        $region24: #{modeler_forward.1} parent=11 // pred_fallthru
          _
        // Predicated region
        $region25: #{modeler_forward.1} parent=11 // pred_check
          %p373 = pneg %p117
        $region26: #{modeler_forward.1} parent=11 // pred_check_branch
          %375 = sbr.rel (%p373) target = $region28
        $region27: #{modeler_forward.1} parent=11 // pred_region
          _
        $region28: #{modeler_forward.1} parent=11 // pred_fallthru
          _
        // Predicated region
        $region29: #{modeler_forward.1} parent=11 // pred_check
          %p376 = pneg %p218
        $region30: #{modeler_forward.1} parent=11 // pred_check_branch
          %378 = sbr.rel (%p376) target = $region32
        $region31: #{modeler_forward.1} parent=11 // pred_region
          _
        $region32: #{modeler_forward.1} parent=11 // pred_fallthru
          _
        // Predicated region
        $region33: #{modeler_forward.1} parent=11 // pred_check
          %p379 = pneg %p239
        $region34: #{modeler_forward.1} parent=11 // pred_check_branch
          %381 = sbr.rel (%p379) target = $region36
        $region35: #{modeler_forward.1} parent=11 // pred_region
          _
        $region36: #{modeler_forward.1} parent=11 // pred_fallthru
          _
        // Predicated region
        $region37: #{modeler_forward.1} parent=11 // pred_check
          %p382 = pneg %p260
        $region38: #{modeler_forward.1} parent=11 // pred_check_branch
          %384 = sbr.rel (%p382) target = $region40
        $region39: #{modeler_forward.1} parent=11 // pred_region
          _
        $region40: #{modeler_forward.1} parent=11 // pred_fallthru
          _
        // Predicated region
        $region41: #{modeler_forward.1} parent=11 // pred_check
          %p385 = pneg %p281
        $region42: #{modeler_forward.1} parent=11 // pred_check_branch
          %387 = sbr.rel (%p385) target = $region44
        $region43: #{modeler_forward.1} parent=11 // pred_region
          _
        $region44: #{modeler_forward.1} parent=11 // pred_fallthru
          _
        // Predicated region
        $region45: #{modeler_forward.1} parent=11 // pred_check
          %p388 = pneg %p302
        $region46: #{modeler_forward.1} parent=11 // pred_check_branch
          %390 = sbr.rel (%p388) target = $region48
        $region47: #{modeler_forward.1} parent=11 // pred_region
          %392 = vsyncadd [#allocation5], 0
          %s394 = sshll.u32 %s11, 4
          %s395 = int_to_ptr.vmem [resolvable:$true] %s394
          %397 = dma.vmem_to_smem %s395, 16, [#allocation4], [#allocation5]
        $region48: #{modeler_forward.1} parent=11 // pred_fallthru
          _
      $region12: #{modeler_forward.1} parent=5 // pred_fallthru
        _
      %p398 = scmp.lt.s32.totalorder %s21, 2
      // Predicated region
      $region49: #{modeler_forward.1} parent=5 // pred_check
        %p399 = pneg %p398
      $region50: #{modeler_forward.1} parent=5 // pred_check_branch
        %401 = sbr.rel (%p399) target = $region52
      $region51: #{modeler_forward.1} parent=5 // pred_region
        // Predicated region
        $region53: #{modeler_forward.1} parent=51 // pred_check
          %p402 = pneg %p139
        $region54: #{modeler_forward.1} parent=51 // pred_check_branch
          %404 = sbr.rel (%p402) target = $region56
        $region55: #{modeler_forward.1} parent=51 // pred_region
          %p405 = scmp.lt.s32.totalorder %s28, 1
          %s406 = scalar_select %p405, %s28, 1
          %p407 = scmp.lt.s32.totalorder %s29, 0
          %s408 = scalar_select %p407, %s29, 0
          %s409 = smul.addr %s406, 2
          %s410 = sadd.s32 %s408, %s409
          %s411 = smul.addr %s410, 4
          %s412 = scalar_lea.vmem %s4, %s411
        $region56: #{modeler_forward.1} parent=51 // pred_fallthru
          _
        // Predicated region
        $region57: #{modeler_forward.1} parent=51 // pred_check
          %p413 = pneg %p165
        $region58: #{modeler_forward.1} parent=51 // pred_check_branch
          %415 = sbr.rel (%p413) target = $region60
        $region59: #{modeler_forward.1} parent=51 // pred_region
          %p416 = scmp.lt.s32.totalorder %s28, 1
          %s417 = scalar_select %p416, %s28, 1
          %s418 = smul.addr %s417, 4
          %s419 = smul.addr %s418, 8
          %s420 = scalar_lea.vmem %s5, %s419
        $region60: #{modeler_forward.1} parent=51 // pred_fallthru
          _
        // Predicated region
        $region61: #{modeler_forward.1} parent=51 // pred_check
          %p421 = pneg %p191
        $region62: #{modeler_forward.1} parent=51 // pred_check_branch
          %423 = sbr.rel (%p421) target = $region64
        $region63: #{modeler_forward.1} parent=51 // pred_region
          %p424 = scmp.lt.s32.totalorder %s28, 1
          %s425 = scalar_select %p424, %s28, 1
          %s426 = scalar_lea.vmem %s6, %s425
        $region64: #{modeler_forward.1} parent=51 // pred_fallthru
          _
      $region52: #{modeler_forward.1} parent=5 // pred_fallthru
        _
      %p427 = scmp.le.s32.totalorder 1, %s21
      %p428 = scmp.lt.s32.totalorder %s21, 3
      %p429 = pnand %p427, %p428
      %p430 = pneg %p429
      // Predicated region
      $region65: #{modeler_forward.1} parent=5 // pred_check
        _
      $region66: #{modeler_forward.1} parent=5 // pred_check_branch
        %432 = sbr.rel (%p429) target = $region68
      $region67: #{modeler_forward.1} parent=5 // pred_region
        %s433 = ssub.s32 %s21, 1
        // Predicated region
        $region69: #{modeler_forward.1} parent=67 // pred_check
          %p434 = pneg %p302
        $region70: #{modeler_forward.1} parent=67 // pred_check_branch
          %436 = sbr.rel (%p434) target = $region72
        $region71: #{modeler_forward.1} parent=67 // pred_region
          %438 = dma.done [#allocation5], 16
        $region72: #{modeler_forward.1} parent=67 // pred_fallthru
          _
        %439 = sfence
        %p440 = pneg %p54
        %p441 = pneg %p51
        %p442 = pneg %p75
        %p443 = pneg %p72
        %p444 = pneg %p96
        %p445 = pneg %p93
        %p446 = pneg %p117
        %p447 = pneg %p114
        %p448 = scmp.lt.s32.totalorder %s30, 1
        %s449 = scalar_select %p448, %s30, 1
        %p450 = scmp.lt.s32.totalorder %s31, 0
        %s451 = scalar_select %p450, %s31, 0
        %s452 = smul.addr %s449, 2
        %s453 = sadd.s32 %s451, %s452
        %s454 = smul.addr %s453, 4
        %s455 = scalar_lea.vmem %s4, %s454
        %p456 = pneg %p145
        %p457 = pneg %p142
        %p458 = scmp.lt.s32.totalorder %s30, 1
        %s459 = scalar_select %p458, %s30, 1
        %s460 = smul.addr %s459, 4
        %s461 = smul.addr %s460, 8
        %s462 = scalar_lea.vmem %s5, %s461
        %p463 = pneg %p171
        %p464 = pneg %p168
        %p465 = scmp.lt.s32.totalorder %s30, 1
        %s466 = scalar_select %p465, %s30, 1
        %s467 = scalar_lea.vmem %s6, %s466
        %p468 = pneg %p197
        %p469 = pneg %p194
        %p470 = pneg %p218
        %p471 = pneg %p215
        %p472 = pneg %p239
        %p473 = pneg %p236
        %p474 = pneg %p260
        %p475 = pneg %p257
        %p476 = pneg %p281
        %p477 = pneg %p278
        %p478 = pneg %p302
        %p479 = pneg %p299
        %p480 = pneg %p328
        %p481 = pneg %p325
        %p482 = scmp.lt.s32.totalorder %s30, 1
        %s483 = scalar_select %p482, %s30, 1
        %s484 = smul.addr %s483, 2
        %s485 = smul.addr %s484, 8
        %s486 = scalar_lea.vmem %s12, %s485
        %p487 = pneg %p349
        %p488 = pneg %p346
        %p489 = scmp.lt.s32.totalorder %s30, 1
        %s490 = scalar_select %p489, %s30, 1
        %p491 = scmp.lt.s32.totalorder %s31, 0
        %s492 = scalar_select %p491, %s31, 0
        %s493 = smul.addr %s490, 2
        %s494 = sadd.s32 %s492, %s493
        %s495 = smul.addr %s494, 4
        %s496 = scalar_lea.vmem %s4, %s495
        %p497 = scmp.lt.s32.totalorder %s30, 1
        %s498 = scalar_select %p497, %s30, 1
        %s499 = smul.addr %s498, 4
        %s500 = smul.addr %s499, 8
        %s501 = scalar_lea.vmem %s5, %s500
        %p502 = scmp.lt.s32.totalorder %s30, 1
        %s503 = scalar_select %p502, %s30, 1
        %s504 = scalar_lea.vmem %s6, %s503
        %p505 = scmp.lt.s32.totalorder %s30, 1
        %s506 = scalar_select %p505, %s30, 1
        %s507 = smul.addr %s506, 2
        %s508 = smul.addr %s507, 8
        %s509 = scalar_lea.vmem %s12, %s508
        %s511 = smul.u32 %s31, 16
        %s512 = scalar_lea.vmem %s0, %s511
        %v513 = vld [vmem:[%s512] sm:$0xff]
        %v514 = vld [vmem:[%s512 + $0x8] sm:$0xff]
        %s515 = scalar_lea.vmem %s1, %s511
        %v516 = vld [vmem:[%s515] sm:$0xff]
        %v517 = vld [vmem:[%s515 + $0x8] sm:$0xff]
        %v518 = vld [vmem:[%s501] sm:$0xff]
        %v519 = vld [vmem:[%s501 + $0x8] sm:$0xff]
        %v520 = vld [vmem:[%s501 + $0x10] sm:$0xff]
        %v521 = vld [vmem:[%s501 + $0x18] sm:$0xff]
        %vm522 = vcmask 261120
        %v524 = vsel %vm522, %v513, 0
        %v527 = vsel %vm522, %v514, 0
        %529 = vmatpush.msra.mxu0 0.0
        %530 = vmatpush.msra.mxu0 0.0
        %531 = vmatpush.msra.mxu0 0.0
        %532 = vmatpush.msra.mxu0 0.0
        %533 = vmatpush.msra.mxu0 0.0
        %534 = vmatpush.msra.mxu0 0.0
        %535 = vmatpush.msra.mxu0 0.0
        %536 = vmatpush.msra.mxu0 0.0
        %537 = vmatpush.msra.mxu0 0.0
        %538 = vmatpush.msra.mxu0 0.0
        %539 = vmatpush.msra.mxu0 0.0
        %540 = vmatpush.msra.mxu0 0.0
        %541 = vmatpush.msra.mxu0 %v521
        %542 = vmatpush.msra.mxu0 %v520
        %543 = vmatpush.msra.mxu0 %v519
        %544 = vmatpush.msra.mxu0 %v518
        %545 = vmatmul.f32.gmra.mxu0 %v524
        %v546 = vpop.f32.mrf.mxu0
        %v547 = vadd.f32 0.0, %v546
        %548 = vmatmul.f32.gmra.mxu0 %v527
        %v549 = vpop.f32.mrf.mxu0
        %v550 = vadd.f32 0.0, %v549
        %551 = vdwg.mxu0
        %v553 = vsel %vm522, %v516, 0
        %v556 = vsel %vm522, %v517, 0
        %558 = vmatpush.msra.mxu0 0.0
        %559 = vmatpush.msra.mxu0 0.0
        %560 = vmatpush.msra.mxu0 0.0
        %561 = vmatpush.msra.mxu0 0.0
        %562 = vmatpush.msra.mxu0 0.0
        %563 = vmatpush.msra.mxu0 0.0
        %564 = vmatpush.msra.mxu0 0.0
        %565 = vmatpush.msra.mxu0 0.0
        %566 = vmatpush.msra.mxu0 0.0
        %567 = vmatpush.msra.mxu0 0.0
        %568 = vmatpush.msra.mxu0 0.0
        %569 = vmatpush.msra.mxu0 0.0
        %570 = vmatpush.msra.mxu0 %v521
        %571 = vmatpush.msra.mxu0 %v520
        %572 = vmatpush.msra.mxu0 %v519
        %573 = vmatpush.msra.mxu0 %v518
        %574 = vmatmul.f32.gmra.mxu0 %v553
        %v575 = vpop.f32.mrf.mxu0
        %v576 = vadd.f32 0.0, %v575
        %577 = vmatmul.f32.gmra.mxu0 %v556
        %v578 = vpop.f32.mrf.mxu0
        %v579 = vadd.f32 0.0, %v578
        %580 = vdwg.mxu0
        %583 = vrot.lane.b32.xlu0 %v576, 16
        %v584 = vpop.permute.xlu0 %583
        %585 = vrot.lane.b32.xlu0 %v579, 16
        %v586 = vpop.permute.xlu0 %585
        %vm589 = vcmask 130048
        %v590 = vsel %vm589, %v547, %v584
        %v591 = vsel %vm589, %v550, %v586
        %v592 = vpack.c.bf16 %v591, %v590
        %v593 = vld [vmem:[%s496] sm:$0xf]
        %v594 = vld [vmem:[%s496 + $0x4] sm:$0xf]
        %v597 = vunpack.c.l.b16 %v593
        %v598 = vunpack.c.l.b16 %v594
        %v599 = vpack.c.b16 %v598, %v597
        %v601 = vsel %vm589, %v599, 0
        %603 = vmatpush.bf16.msra.mxu0 0
        %604 = vmatpush.bf16.msra.mxu0 0
        %605 = vmatpush.bf16.msra.mxu0 0
        %606 = vmatpush.bf16.msra.mxu0 0
        %607 = vmatpush.bf16.msra.mxu0 0
        %608 = vmatpush.bf16.msra.mxu0 0
        %609 = vmatpush.bf16.msra.mxu0 0
        %610 = vmatpush.bf16.msra.mxu0 %v592
        %611 = vmatmul.bf16.gmra.mxu0 %v601
        %v612 = vpop.f32.mrf.mxu0
        %v613 = vadd.f32 0.0, %v612
        %v614 = vpop.f32.mrf.mxu0
        %v615 = vadd.f32 0.0, %v614
        %616 = vdwg.mxu0
        %p617 = scmp.eq.s32.totalorder %s31, 0
        // Predicated region
        $region73: #{modeler_forward.1} parent=67 // pred_check
          %p618 = pneg %p617
        $region74: #{modeler_forward.1} parent=67 // pred_check_branch
          %620 = sbr.rel (%p618) target = $region76
        $region75: #{modeler_forward.1} parent=67 // pred_region
          %621 = vst.msk [vmem:[#allocation2] sm:$0xff] %vm522, 0.0
          %622 = vst.msk [vmem:[#allocation2 + $0x8] sm:$0xff] %vm522, 0.0
        $region76: #{modeler_forward.1} parent=67 // pred_fallthru
          _
        %v623 = vld [vmem:[#allocation2] sm:$0xff]
        %v624 = vld [vmem:[#allocation2 + $0x8] sm:$0xff]
        %v625 = vadd.f32 %v623, %v613
        %v626 = vadd.f32 %v624, %v615
        %627 = vst.msk [vmem:[#allocation2] sm:$0xff] %vm522, %v625
        %628 = vst.msk [vmem:[#allocation2 + $0x8] sm:$0xff] %vm522, %v626
        // Predicated region
        $region77: #{modeler_forward.1} parent=67 // pred_check
          %p629 = pneg %p617
        $region78: #{modeler_forward.1} parent=67 // pred_check_branch
          %631 = sbr.rel (%p629) target = $region80
        $region79: #{modeler_forward.1} parent=67 // pred_region
          %v632 = vld [vmem:[%s504] sm:$0x1]
          %v633 = vld [vmem:[#allocation2] sm:$0xff]
          %v634 = vld [vmem:[#allocation2 + $0x8] sm:$0xff]
          %v636 = vperm.slane %v632, 0
          %637 = vrot.lane.b32.xlu0 %v636, 16
          %v638 = vpop.permute.xlu0 %637
          %v640 = vsel %vm589, %v632, %v638
          %v641 = vperm.slane %v640, 0
          %v642 = vadd.f32 %v633, %v641
          %v643 = vadd.f32 %v634, %v641
          %s644 = sadd.s32 %s30, 3
          %s645 = sld [smem:[#allocation4 + %s644]]
          %vm646 = vcmp.gt.f32.partialorder %v642, 0.0
          %vm647 = vcmp.gt.f32.partialorder %v643, 0.0
          %v648 = vstv %s645
          %v649 = vmul.f32 %v648, %v642
          %v650 = vmul.f32 %v648, %v643
          %v651 = vsel %vm646, %v642, %v649
          %v652 = vsel %vm647, %v643, %v650
          %s653 = smul.u32 %s30, 16
          %s654 = scalar_lea.vmem [#allocation3], %s653
          %655 = vst.msk [vmem:[%s654] sm:$0xff] %vm522, %v651
          %656 = vst.msk [vmem:[%s654 + $0x8] sm:$0xff] %vm522, %v652
          %v657 = vld [vmem:[%s0] sm:$0xff]
          %v658 = vld [vmem:[%s0 + $0x8] sm:$0xff]
          %v659 = vld [vmem:[%s1] sm:$0xff]
          %v660 = vld [vmem:[%s1 + $0x8] sm:$0xff]
          %v661 = vld [vmem:[%s2] sm:$0xff]
          %v662 = vld [vmem:[%s2 + $0x8] sm:$0xff]
          %v663 = vld [vmem:[%s3] sm:$0xff]
          %v664 = vld [vmem:[%s3 + $0x8] sm:$0xff]
          %v665 = vld [vmem:[%s8] sm:$0xff]
          %v666 = vld [vmem:[%s8 + $0x8] sm:$0xff]
          %s667 = scalar_lea.vmem %s8, 16
          %v668 = vld [vmem:[%s667] sm:$0xff]
          %v669 = vld [vmem:[%s667 + $0x8] sm:$0xff]
          %s670 = scalar_lea.vmem %s8, 32
          %v671 = vld [vmem:[%s670] sm:$0xff]
          %v672 = vld [vmem:[%s670 + $0x8] sm:$0xff]
          %v673 = vld [vmem:[%s10] sm:$0x1]
          %s674 = sld [smem:[#allocation4]]
          %s675 = sld [smem:[#allocation4 + $0x1]]
          %s676 = sld [smem:[#allocation4 + $0x2]]
          %v677 = vsel %vm589, %v651, 0.0
          %v678 = vsel %vm589, %v652, 0.0
          %v679 = vadd.f32 %v677, %v678
          %v680 = vrot.slane %v679, 4
          %v681 = vadd.f32 %v679, %v680
          %v682 = vrot.slane %v681, 2
          %v683 = vadd.f32 %v681, %v682
          %v684 = vrot.slane %v683, 1
          %v685 = vadd.f32 %v683, %v684
          %v686 = vmul.f32 %v685, 0.0625
          %v688 = vsel %vm589, %v686, 0
          %690 = vmatpush.msra.mxu0 0.0
          %691 = vmatpush.msra.mxu0 0.0
          %692 = vmatpush.msra.mxu0 0.0
          %693 = vmatpush.msra.mxu0 0.0
          %694 = vmatpush.msra.mxu0 0.0
          %695 = vmatpush.msra.mxu0 0.0
          %696 = vmatpush.msra.mxu0 0.0
          %697 = vmatpush.msra.mxu0 0.0
          %698 = vmatpush.msra.mxu0 0.0
          %699 = vmatpush.msra.mxu0 0.0
          %700 = vmatpush.msra.mxu0 0.0
          %701 = vmatpush.msra.mxu0 0.0
          %702 = vmatpush.msra.mxu0 0.0
          %703 = vmatpush.msra.mxu0 0.0
          %704 = vmatpush.msra.mxu0 %v666
          %705 = vmatpush.msra.mxu0 %v665
          %706 = vmatmul.f32.gmra.mxu0 %v688
          %v707 = vpop.f32.mrf.mxu0
          %v708 = vadd.f32 0.0, %v707
          %709 = vdwg.mxu0
          %v710 = vperm.slane %v708, 0
          %v711 = vmul.f32 %v651, %v710
          %v712 = vmul.f32 %v652, %v710
          %v713 = vsel %vm589, %v711, 0.0
          %714 = vadd.xlane.f32.xlu0 %v713
          %v715 = vpop.xlane.xlu0 %714
          %v716 = vsel %vm589, %v712, 0.0
          %717 = vadd.xlane.f32.xlu0 %v716
          %v718 = vpop.xlane.xlu0 %717
          %v719 = vstv %s674
          %v720 = vadd.f32 %v715, %v719
          %v721 = vadd.f32 %v718, %v719
          %723 = vrot.lane.b32.xlu0 %v710, 16
          %v724 = vpop.permute.xlu0 %723
          %v726 = vmul.f32 %v651, %v724
          %v727 = vmul.f32 %v652, %v724
          %730 = vrot.lane.b32.xlu0 %v726, 112
          %v731 = vpop.permute.xlu0 %730
          %732 = vrot.lane.b32.xlu0 %v727, 112
          %v733 = vpop.permute.xlu0 %732
          %v736 = vsel %vm589, %v731, 0.0
          %737 = vadd.xlane.f32.xlu0 %v736
          %v738 = vpop.xlane.xlu0 %737
          %v739 = vsel %vm589, %v733, 0.0
          %740 = vadd.xlane.f32.xlu0 %v739
          %v741 = vpop.xlane.xlu0 %740
          %v742 = vadd.f32 %v738, %v719
          %v743 = vadd.f32 %v741, %v719
          %v744 = vld [vmem:[%s9] sm:$0xff]
          %v745 = vld [vmem:[%s9 + $0x8] sm:$0xff]
          %v747 = vsel %vm589, %v651, 0
          %v750 = vsel %vm589, %v652, 0
          %752 = vmatpush.msra.mxu0 0.0
          %753 = vmatpush.msra.mxu0 0.0
          %754 = vmatpush.msra.mxu0 0.0
          %755 = vmatpush.msra.mxu0 0.0
          %756 = vmatpush.msra.mxu0 0.0
          %757 = vmatpush.msra.mxu0 0.0
          %758 = vmatpush.msra.mxu0 0.0
          %759 = vmatpush.msra.mxu0 0.0
          %760 = vmatpush.msra.mxu0 0.0
          %761 = vmatpush.msra.mxu0 0.0
          %762 = vmatpush.msra.mxu0 0.0
          %763 = vmatpush.msra.mxu0 0.0
          %764 = vmatpush.msra.mxu0 0.0
          %765 = vmatpush.msra.mxu0 0.0
          %766 = vmatpush.msra.mxu0 %v745
          %767 = vmatpush.msra.mxu0 %v744
          %768 = vmatmul.f32.gmra.mxu0 %v747
          %v769 = vpop.f32.mrf.mxu0
          %v770 = vadd.f32 0.0, %v769
          %771 = vmatmul.f32.gmra.mxu0 %v750
          %v772 = vpop.f32.mrf.mxu0
          %v773 = vadd.f32 0.0, %v772
          %774 = vdwg.mxu0
          %v775 = vmul.f32 %v770, %v657
          %v776 = vmul.f32 %v773, %v658
          %v777 = vsel %vm522, %v775, 0.0
          %778 = vadd.xlane.f32.xlu0 %v777
          %v779 = vpop.xlane.xlu0 %778
          %v780 = vsel %vm522, %v776, 0.0
          %781 = vadd.xlane.f32.xlu0 %v780
          %v782 = vpop.xlane.xlu0 %781
          %v783 = vstv %s675
          %v784 = vadd.f32 %v779, %v783
          %v785 = vadd.f32 %v782, %v783
          %v786 = vmul.f32 %v770, %v659
          %v787 = vmul.f32 %v773, %v660
          %v788 = vsel %vm522, %v786, 0.0
          %789 = vadd.xlane.f32.xlu0 %v788
          %v790 = vpop.xlane.xlu0 %789
          %v791 = vsel %vm522, %v787, 0.0
          %792 = vadd.xlane.f32.xlu0 %v791
          %v793 = vpop.xlane.xlu0 %792
          %v794 = vadd.f32 %v790, %v783
          %v795 = vadd.f32 %v793, %v783
          %796 = vmatpush.msra.mxu0 0.0
          %797 = vmatpush.msra.mxu0 0.0
          %798 = vmatpush.msra.mxu0 0.0
          %799 = vmatpush.msra.mxu0 0.0
          %800 = vmatpush.msra.mxu0 0.0
          %801 = vmatpush.msra.mxu0 0.0
          %802 = vmatpush.msra.mxu0 0.0
          %803 = vmatpush.msra.mxu0 0.0
          %804 = vmatpush.msra.mxu0 0.0
          %805 = vmatpush.msra.mxu0 0.0
          %806 = vmatpush.msra.mxu0 0.0
          %807 = vmatpush.msra.mxu0 0.0
          %808 = vmatpush.msra.mxu0 0.0
          %809 = vmatpush.msra.mxu0 0.0
          %810 = vmatpush.msra.mxu0 %v672
          %811 = vmatpush.msra.mxu0 %v671
          %812 = vmatmul.f32.gmra.mxu0 %v688
          %v813 = vpop.f32.mrf.mxu0
          %v814 = vadd.f32 %v673, %v813
          %815 = vdwg.mxu0
          %v816 = vperm.slane %v814, 0
          %v817 = vadd.f32 %v816, %v661
          %v818 = vadd.f32 %v816, %v662
          %v819 = vtanh.pop %v817
          %v820 = vtanh.pop %v818
          %v821 = vadd.f32 %v816, %v663
          %v822 = vadd.f32 %v816, %v664
          %v823 = vtanh.pop %v821
          %v824 = vtanh.pop %v822
          %825 = vmatpush.msra.mxu0 0.0
          %826 = vmatpush.msra.mxu0 0.0
          %827 = vmatpush.msra.mxu0 0.0
          %828 = vmatpush.msra.mxu0 0.0
          %829 = vmatpush.msra.mxu0 0.0
          %830 = vmatpush.msra.mxu0 0.0
          %831 = vmatpush.msra.mxu0 0.0
          %832 = vmatpush.msra.mxu0 0.0
          %833 = vmatpush.msra.mxu0 0.0
          %834 = vmatpush.msra.mxu0 0.0
          %835 = vmatpush.msra.mxu0 0.0
          %836 = vmatpush.msra.mxu0 0.0
          %837 = vmatpush.msra.mxu0 0.0
          %838 = vmatpush.msra.mxu0 0.0
          %839 = vmatpush.msra.mxu0 %v669
          %840 = vmatpush.msra.mxu0 %v668
          %841 = vmatmul.f32.gmra.mxu0 %v747
          %v842 = vpop.f32.mrf.mxu0
          %v843 = vadd.f32 0.0, %v842
          %844 = vmatmul.f32.gmra.mxu0 %v750
          %v845 = vpop.f32.mrf.mxu0
          %v846 = vadd.f32 0.0, %v845
          %847 = vdwg.mxu0
          %v848 = vmul.f32 %v843, %v819
          %v849 = vmul.f32 %v846, %v820
          %v850 = vsel %vm589, %v848, 0.0
          %851 = vadd.xlane.f32.xlu0 %v850
          %v852 = vpop.xlane.xlu0 %851
          %v853 = vsel %vm589, %v849, 0.0
          %854 = vadd.xlane.f32.xlu0 %v853
          %v855 = vpop.xlane.xlu0 %854
          %v856 = vstv %s676
          %v857 = vadd.f32 %v852, %v856
          %v858 = vadd.f32 %v855, %v856
          %859 = vrot.lane.b32.xlu0 %v651, 112
          %v860 = vpop.permute.xlu0 %859
          %861 = vrot.lane.b32.xlu0 %v652, 112
          %v862 = vpop.permute.xlu0 %861
          %v863 = vsel %vm589, %v860, 0
          %v865 = vsel %vm589, %v862, 0
          %867 = vmatpush.msra.mxu0 0.0
          %868 = vmatpush.msra.mxu0 0.0
          %869 = vmatpush.msra.mxu0 0.0
          %870 = vmatpush.msra.mxu0 0.0
          %871 = vmatpush.msra.mxu0 0.0
          %872 = vmatpush.msra.mxu0 0.0
          %873 = vmatpush.msra.mxu0 0.0
          %874 = vmatpush.msra.mxu0 0.0
          %875 = vmatpush.msra.mxu0 0.0
          %876 = vmatpush.msra.mxu0 0.0
          %877 = vmatpush.msra.mxu0 0.0
          %878 = vmatpush.msra.mxu0 0.0
          %879 = vmatpush.msra.mxu0 0.0
          %880 = vmatpush.msra.mxu0 0.0
          %881 = vmatpush.msra.mxu0 %v669
          %882 = vmatpush.msra.mxu0 %v668
          %883 = vmatmul.f32.gmra.mxu0 %v863
          %v884 = vpop.f32.mrf.mxu0
          %v885 = vadd.f32 0.0, %v884
          %886 = vmatmul.f32.gmra.mxu0 %v865
          %v887 = vpop.f32.mrf.mxu0
          %v888 = vadd.f32 0.0, %v887
          %889 = vdwg.mxu0
          %v890 = vmul.f32 %v885, %v823
          %v891 = vmul.f32 %v888, %v824
          %v892 = vsel %vm589, %v890, 0.0
          %893 = vadd.xlane.f32.xlu0 %v892
          %v894 = vpop.xlane.xlu0 %893
          %v895 = vsel %vm589, %v891, 0.0
          %896 = vadd.xlane.f32.xlu0 %v895
          %v897 = vpop.xlane.xlu0 %896
          %v898 = vadd.f32 %v894, %v856
          %v899 = vadd.f32 %v897, %v856
          %vm900 = vcmask 7168
          %v901 = vsel %vm900, %v720, %v742
          %v902 = vsel %vm900, %v721, %v743
          %vm903 = vcmask 15360
          %v904 = vsel %vm903, %v901, %v784
          %v905 = vsel %vm903, %v902, %v785
          %vm906 = vcmask 23552
          %v907 = vsel %vm906, %v904, %v794
          %v908 = vsel %vm906, %v905, %v795
          %vm909 = vcmask 31744
          %v910 = vsel %vm909, %v907, %v857
          %v911 = vsel %vm909, %v908, %v858
          %vm912 = vcmask 39936
          %v913 = vsel %vm912, %v910, %v898
          %v914 = vsel %vm912, %v911, %v899
          %vm915 = vcmask 48128
          %v916 = vsel %vm915, %v913, 0.0
          %v917 = vsel %vm915, %v914, 0.0
          %918 = vst [vmem:[%s509] sm:$0xff] %v916
          %919 = vst [vmem:[%s509 + $0x8] sm:$0xff] %v917
        $region80: #{modeler_forward.1} parent=67 // pred_fallthru
          _
        %p920 = scmp.eq.s32.totalorder %s30, 1
        %p921 = pnand %p920, %p617
        %p922 = pneg %p921
        // Predicated region
        $region81: #{modeler_forward.1} parent=67 // pred_check
          _
        $region82: #{modeler_forward.1} parent=67 // pred_check_branch
          %924 = sbr.rel (%p921) target = $region84
        $region83: #{modeler_forward.1} parent=67 // pred_region
          %v925 = vld [vmem:[%s7] sm:$0xff]
          %v926 = vld [vmem:[%s7 + $0x8] sm:$0xff]
          %vm927 = vcmask 7168
          %v928 = vsel %vm927, %v925, 0.0
          %v929 = vsel %vm927, %v926, 0.0
          %932 = vrot.lane.b32.xlu0 %v925, 1
          %v933 = vpop.permute.xlu0 %932
          %934 = vrot.lane.b32.xlu0 %v926, 1
          %v935 = vpop.permute.xlu0 %934
          %v938 = vsel %vm927, 0.0, %v933
          %v939 = vsel %vm927, 0.0, %v935
          %s940 = sld [smem:[#allocation4 + $0x5]]
          %v941 = vld [vmem:[#allocation3] sm:$0xff]
          %v942 = vld [vmem:[#allocation3 + $0x8] sm:$0xff]
          %v943 = vstv %s940
          %v945 = vsel %vm522, %v941, 0
          %v948 = vsel %vm522, %v942, 0
          %950 = vmatpush.msra.mxu0 0.0
          %951 = vmatpush.msra.mxu0 0.0
          %952 = vmatpush.msra.mxu0 0.0
          %953 = vmatpush.msra.mxu0 0.0
          %954 = vmatpush.msra.mxu0 0.0
          %955 = vmatpush.msra.mxu0 0.0
          %956 = vmatpush.msra.mxu0 0.0
          %957 = vmatpush.msra.mxu0 0.0
          %958 = vmatpush.msra.mxu0 0.0
          %959 = vmatpush.msra.mxu0 0.0
          %960 = vmatpush.msra.mxu0 0.0
          %961 = vmatpush.msra.mxu0 0.0
          %962 = vmatpush.msra.mxu0 %v939
          %963 = vmatpush.msra.mxu0 %v938
          %964 = vmatpush.msra.mxu0 %v929
          %965 = vmatpush.msra.mxu0 %v928
          %966 = vmatmul.f32.gmra.mxu0 %v945
          %v967 = vpop.f32.mrf.mxu0
          %v968 = vadd.f32 %v943, %v967
          %969 = vmatmul.f32.gmra.mxu0 %v948
          %v970 = vpop.f32.mrf.mxu0
          %v971 = vadd.f32 %v943, %v970
          %972 = vdwg.mxu0
          %v973 = vtanh.pop %v968
          %v974 = vtanh.pop %v971
          %s975 = scalar_lea.vmem %s7, 16
          %v976 = vld [vmem:[%s975] sm:$0xff]
          %v977 = vld [vmem:[%s975 + $0x8] sm:$0xff]
          %v978 = vsel %vm927, %v976, 0.0
          %v979 = vsel %vm927, %v977, 0.0
          %982 = vrot.lane.b32.xlu0 %v976, 1
          %v983 = vpop.permute.xlu0 %982
          %984 = vrot.lane.b32.xlu0 %v977, 1
          %v985 = vpop.permute.xlu0 %984
          %v988 = vsel %vm927, 0.0, %v983
          %v989 = vsel %vm927, 0.0, %v985
          %s990 = sld [smem:[#allocation4 + $0x6]]
          %s991 = scalar_lea.vmem [#allocation3], 16
          %v992 = vld [vmem:[%s991] sm:$0xff]
          %v993 = vld [vmem:[%s991 + $0x8] sm:$0xff]
          %v994 = vstv %s990
          %v996 = vsel %vm522, %v992, 0
          %v999 = vsel %vm522, %v993, 0
          %1001 = vmatpush.msra.mxu0 0.0
          %1002 = vmatpush.msra.mxu0 0.0
          %1003 = vmatpush.msra.mxu0 0.0
          %1004 = vmatpush.msra.mxu0 0.0
          %1005 = vmatpush.msra.mxu0 0.0
          %1006 = vmatpush.msra.mxu0 0.0
          %1007 = vmatpush.msra.mxu0 0.0
          %1008 = vmatpush.msra.mxu0 0.0
          %1009 = vmatpush.msra.mxu0 0.0
          %1010 = vmatpush.msra.mxu0 0.0
          %1011 = vmatpush.msra.mxu0 0.0
          %1012 = vmatpush.msra.mxu0 0.0
          %1013 = vmatpush.msra.mxu0 %v989
          %1014 = vmatpush.msra.mxu0 %v988
          %1015 = vmatpush.msra.mxu0 %v979
          %1016 = vmatpush.msra.mxu0 %v978
          %1017 = vmatmul.f32.gmra.mxu0 %v996
          %v1018 = vpop.f32.mrf.mxu0
          %v1019 = vadd.f32 %v994, %v1018
          %1020 = vmatmul.f32.gmra.mxu0 %v999
          %v1021 = vpop.f32.mrf.mxu0
          %v1022 = vadd.f32 %v994, %v1021
          %1023 = vdwg.mxu0
          %v1024 = vtanh.pop %v1019
          %v1025 = vtanh.pop %v1022
          %v1026 = vmax.f32 %v973, %v1024
          %v1027 = vmax.f32 %v974, %v1025
          %v1028 = vsub.f32 %v973, %v1026
          %v1029 = vsub.f32 %v974, %v1027
          %v1030 = vmul.f32 %v1028, 1.442695
          %v1031 = vpow.pop %v1030
          %v1032 = vmul.f32 %v1029, 1.442695
          %v1033 = vpow.pop %v1032
          %v1034 = vsub.f32 %v1024, %v1026
          %v1035 = vsub.f32 %v1025, %v1027
          %v1036 = vmul.f32 %v1034, 1.442695
          %v1037 = vpow.pop %v1036
          %v1038 = vmul.f32 %v1035, 1.442695
          %v1039 = vpow.pop %v1038
          %v1040 = vadd.f32 %v1031, %v1037
          %v1041 = vadd.f32 %v1033, %v1039
          %v1042 = vrcp.pop %v1040
          %v1043 = vrcp.pop %v1041
          %v1044 = vmul.f32 %v1031, %v1042
          %v1045 = vmul.f32 %v1033, %v1043
          %1047 = vset.pattern.permute.xlu0 0
          %1048 = vperm.xlu0 %1047, %v1044
          %v1049 = vpop.permute.xlu0 %1048
          %1052 = vset.pattern.permute.xlu0 0
          %1053 = vperm.xlu0 %1052, %v1045
          %v1054 = vpop.permute.xlu0 %1053
          %v1056 = vmul.f32 %v1049, %v941
          %v1057 = vmul.f32 %v1054, %v942
          %1058 = vset.pattern.permute.xlu0 1
          %1059 = vperm.xlu0 %1058, %v1044
          %v1060 = vpop.permute.xlu0 %1059
          %1062 = vset.pattern.permute.xlu0 1
          %1063 = vperm.xlu0 %1062, %v1045
          %v1064 = vpop.permute.xlu0 %1063
          %v1066 = vmul.f32 %v1060, %v941
          %v1067 = vmul.f32 %v1064, %v942
          %v1068 = vmul.f32 %v1037, %v1042
          %v1069 = vmul.f32 %v1039, %v1043
          %1071 = vset.pattern.permute.xlu0 0
          %1072 = vperm.xlu0 %1071, %v1068
          %v1073 = vpop.permute.xlu0 %1072
          %1076 = vset.pattern.permute.xlu0 0
          %1077 = vperm.xlu0 %1076, %v1069
          %v1078 = vpop.permute.xlu0 %1077
          %v1080 = vmul.f32 %v1073, %v992
          %v1081 = vmul.f32 %v1078, %v993
          %v1082 = vadd.f32 %v1056, %v1080
          %v1083 = vadd.f32 %v1057, %v1081
          %1084 = vset.pattern.permute.xlu0 1
          %1085 = vperm.xlu0 %1084, %v1068
          %v1086 = vpop.permute.xlu0 %1085
          %1088 = vset.pattern.permute.xlu0 1
          %1089 = vperm.xlu0 %1088, %v1069
          %v1090 = vpop.permute.xlu0 %1089
          %v1092 = vmul.f32 %v1086, %v992
          %v1093 = vmul.f32 %v1090, %v993
          %v1094 = vadd.f32 %v1066, %v1092
          %v1095 = vadd.f32 %v1067, %v1093
          %v1096 = vld [vmem:[%s0] sm:$0xff]
          %v1097 = vld [vmem:[%s0 + $0x8] sm:$0xff]
          %v1098 = vld [vmem:[%s1] sm:$0xff]
          %v1099 = vld [vmem:[%s1 + $0x8] sm:$0xff]
          %v1100 = vld [vmem:[%s2] sm:$0xff]
          %v1101 = vld [vmem:[%s2 + $0x8] sm:$0xff]
          %v1102 = vld [vmem:[%s3] sm:$0xff]
          %v1103 = vld [vmem:[%s3 + $0x8] sm:$0xff]
          %v1104 = vld [vmem:[%s8] sm:$0xff]
          %v1105 = vld [vmem:[%s8 + $0x8] sm:$0xff]
          %s1106 = scalar_lea.vmem %s8, 16
          %v1107 = vld [vmem:[%s1106] sm:$0xff]
          %v1108 = vld [vmem:[%s1106 + $0x8] sm:$0xff]
          %s1109 = scalar_lea.vmem %s8, 32
          %v1110 = vld [vmem:[%s1109] sm:$0xff]
          %v1111 = vld [vmem:[%s1109 + $0x8] sm:$0xff]
          %v1112 = vld [vmem:[%s10] sm:$0x1]
          %s1113 = sld [smem:[#allocation4]]
          %s1114 = sld [smem:[#allocation4 + $0x1]]
          %s1115 = sld [smem:[#allocation4 + $0x2]]
          %v1116 = vsel %vm589, %v1082, 0.0
          %v1117 = vsel %vm589, %v1083, 0.0
          %v1118 = vadd.f32 %v1116, %v1117
          %v1119 = vrot.slane %v1118, 4
          %v1120 = vadd.f32 %v1118, %v1119
          %v1121 = vrot.slane %v1120, 2
          %v1122 = vadd.f32 %v1120, %v1121
          %v1123 = vrot.slane %v1122, 1
          %v1124 = vadd.f32 %v1122, %v1123
          %v1125 = vmul.f32 %v1124, 0.0625
          %v1127 = vsel %vm589, %v1125, 0
          %1129 = vmatpush.msra.mxu0 0.0
          %1130 = vmatpush.msra.mxu0 0.0
          %1131 = vmatpush.msra.mxu0 0.0
          %1132 = vmatpush.msra.mxu0 0.0
          %1133 = vmatpush.msra.mxu0 0.0
          %1134 = vmatpush.msra.mxu0 0.0
          %1135 = vmatpush.msra.mxu0 0.0
          %1136 = vmatpush.msra.mxu0 0.0
          %1137 = vmatpush.msra.mxu0 0.0
          %1138 = vmatpush.msra.mxu0 0.0
          %1139 = vmatpush.msra.mxu0 0.0
          %1140 = vmatpush.msra.mxu0 0.0
          %1141 = vmatpush.msra.mxu0 0.0
          %1142 = vmatpush.msra.mxu0 0.0
          %1143 = vmatpush.msra.mxu0 %v1105
          %1144 = vmatpush.msra.mxu0 %v1104
          %1145 = vmatmul.f32.gmra.mxu0 %v1127
          %v1146 = vpop.f32.mrf.mxu0
          %v1147 = vadd.f32 0.0, %v1146
          %1148 = vdwg.mxu0
          %v1149 = vperm.slane %v1147, 0
          %v1150 = vmul.f32 %v1082, %v1149
          %v1151 = vmul.f32 %v1083, %v1149
          %v1152 = vsel %vm589, %v1150, 0.0
          %1153 = vadd.xlane.f32.xlu0 %v1152
          %v1154 = vpop.xlane.xlu0 %1153
          %v1155 = vsel %vm589, %v1151, 0.0
          %1156 = vadd.xlane.f32.xlu0 %v1155
          %v1157 = vpop.xlane.xlu0 %1156
          %v1158 = vstv %s1113
          %v1159 = vadd.f32 %v1154, %v1158
          %v1160 = vadd.f32 %v1157, %v1158
          %1162 = vrot.lane.b32.xlu0 %v1149, 16
          %v1163 = vpop.permute.xlu0 %1162
          %v1165 = vmul.f32 %v1094, %v1163
          %v1166 = vmul.f32 %v1095, %v1163
          %1169 = vrot.lane.b32.xlu0 %v1165, 112
          %v1170 = vpop.permute.xlu0 %1169
          %1171 = vrot.lane.b32.xlu0 %v1166, 112
          %v1172 = vpop.permute.xlu0 %1171
          %v1175 = vsel %vm589, %v1170, 0.0
          %1176 = vadd.xlane.f32.xlu0 %v1175
          %v1177 = vpop.xlane.xlu0 %1176
          %v1178 = vsel %vm589, %v1172, 0.0
          %1179 = vadd.xlane.f32.xlu0 %v1178
          %v1180 = vpop.xlane.xlu0 %1179
          %v1181 = vadd.f32 %v1177, %v1158
          %v1182 = vadd.f32 %v1180, %v1158
          %v1183 = vld [vmem:[%s9] sm:$0xff]
          %v1184 = vld [vmem:[%s9 + $0x8] sm:$0xff]
          %v1186 = vsel %vm589, %v1082, 0
          %v1189 = vsel %vm589, %v1083, 0
          %1191 = vmatpush.msra.mxu0 0.0
          %1192 = vmatpush.msra.mxu0 0.0
          %1193 = vmatpush.msra.mxu0 0.0
          %1194 = vmatpush.msra.mxu0 0.0
          %1195 = vmatpush.msra.mxu0 0.0
          %1196 = vmatpush.msra.mxu0 0.0
          %1197 = vmatpush.msra.mxu0 0.0
          %1198 = vmatpush.msra.mxu0 0.0
          %1199 = vmatpush.msra.mxu0 0.0
          %1200 = vmatpush.msra.mxu0 0.0
          %1201 = vmatpush.msra.mxu0 0.0
          %1202 = vmatpush.msra.mxu0 0.0
          %1203 = vmatpush.msra.mxu0 0.0
          %1204 = vmatpush.msra.mxu0 0.0
          %1205 = vmatpush.msra.mxu0 %v1184
          %1206 = vmatpush.msra.mxu0 %v1183
          %1207 = vmatmul.f32.gmra.mxu0 %v1186
          %v1208 = vpop.f32.mrf.mxu0
          %v1209 = vadd.f32 0.0, %v1208
          %1210 = vmatmul.f32.gmra.mxu0 %v1189
          %v1211 = vpop.f32.mrf.mxu0
          %v1212 = vadd.f32 0.0, %v1211
          %1213 = vdwg.mxu0
          %v1214 = vmul.f32 %v1209, %v1096
          %v1215 = vmul.f32 %v1212, %v1097
          %v1216 = vsel %vm522, %v1214, 0.0
          %1217 = vadd.xlane.f32.xlu0 %v1216
          %v1218 = vpop.xlane.xlu0 %1217
          %v1219 = vsel %vm522, %v1215, 0.0
          %1220 = vadd.xlane.f32.xlu0 %v1219
          %v1221 = vpop.xlane.xlu0 %1220
          %v1222 = vstv %s1114
          %v1223 = vadd.f32 %v1218, %v1222
          %v1224 = vadd.f32 %v1221, %v1222
          %v1225 = vmul.f32 %v1209, %v1098
          %v1226 = vmul.f32 %v1212, %v1099
          %v1227 = vsel %vm522, %v1225, 0.0
          %1228 = vadd.xlane.f32.xlu0 %v1227
          %v1229 = vpop.xlane.xlu0 %1228
          %v1230 = vsel %vm522, %v1226, 0.0
          %1231 = vadd.xlane.f32.xlu0 %v1230
          %v1232 = vpop.xlane.xlu0 %1231
          %v1233 = vadd.f32 %v1229, %v1222
          %v1234 = vadd.f32 %v1232, %v1222
          %1235 = vmatpush.msra.mxu0 0.0
          %1236 = vmatpush.msra.mxu0 0.0
          %1237 = vmatpush.msra.mxu0 0.0
          %1238 = vmatpush.msra.mxu0 0.0
          %1239 = vmatpush.msra.mxu0 0.0
          %1240 = vmatpush.msra.mxu0 0.0
          %1241 = vmatpush.msra.mxu0 0.0
          %1242 = vmatpush.msra.mxu0 0.0
          %1243 = vmatpush.msra.mxu0 0.0
          %1244 = vmatpush.msra.mxu0 0.0
          %1245 = vmatpush.msra.mxu0 0.0
          %1246 = vmatpush.msra.mxu0 0.0
          %1247 = vmatpush.msra.mxu0 0.0
          %1248 = vmatpush.msra.mxu0 0.0
          %1249 = vmatpush.msra.mxu0 %v1111
          %1250 = vmatpush.msra.mxu0 %v1110
          %1251 = vmatmul.f32.gmra.mxu0 %v1127
          %v1252 = vpop.f32.mrf.mxu0
          %v1253 = vadd.f32 %v1112, %v1252
          %1254 = vdwg.mxu0
          %v1255 = vperm.slane %v1253, 0
          %v1256 = vadd.f32 %v1255, %v1100
          %v1257 = vadd.f32 %v1255, %v1101
          %v1258 = vtanh.pop %v1256
          %v1259 = vtanh.pop %v1257
          %v1260 = vadd.f32 %v1255, %v1102
          %v1261 = vadd.f32 %v1255, %v1103
          %v1262 = vtanh.pop %v1260
          %v1263 = vtanh.pop %v1261
          %1264 = vmatpush.msra.mxu0 0.0
          %1265 = vmatpush.msra.mxu0 0.0
          %1266 = vmatpush.msra.mxu0 0.0
          %1267 = vmatpush.msra.mxu0 0.0
          %1268 = vmatpush.msra.mxu0 0.0
          %1269 = vmatpush.msra.mxu0 0.0
          %1270 = vmatpush.msra.mxu0 0.0
          %1271 = vmatpush.msra.mxu0 0.0
          %1272 = vmatpush.msra.mxu0 0.0
          %1273 = vmatpush.msra.mxu0 0.0
          %1274 = vmatpush.msra.mxu0 0.0
          %1275 = vmatpush.msra.mxu0 0.0
          %1276 = vmatpush.msra.mxu0 0.0
          %1277 = vmatpush.msra.mxu0 0.0
          %1278 = vmatpush.msra.mxu0 %v1108
          %1279 = vmatpush.msra.mxu0 %v1107
          %1280 = vmatmul.f32.gmra.mxu0 %v1186
          %v1281 = vpop.f32.mrf.mxu0
          %v1282 = vadd.f32 0.0, %v1281
          %1283 = vmatmul.f32.gmra.mxu0 %v1189
          %v1284 = vpop.f32.mrf.mxu0
          %v1285 = vadd.f32 0.0, %v1284
          %1286 = vdwg.mxu0
          %v1287 = vmul.f32 %v1282, %v1258
          %v1288 = vmul.f32 %v1285, %v1259
          %v1289 = vsel %vm589, %v1287, 0.0
          %1290 = vadd.xlane.f32.xlu0 %v1289
          %v1291 = vpop.xlane.xlu0 %1290
          %v1292 = vsel %vm589, %v1288, 0.0
          %1293 = vadd.xlane.f32.xlu0 %v1292
          %v1294 = vpop.xlane.xlu0 %1293
          %v1295 = vstv %s1115
          %v1296 = vadd.f32 %v1291, %v1295
          %v1297 = vadd.f32 %v1294, %v1295
          %1300 = vrot.lane.b32.xlu0 %v1094, 112
          %v1301 = vpop.permute.xlu0 %1300
          %1302 = vrot.lane.b32.xlu0 %v1095, 112
          %v1303 = vpop.permute.xlu0 %1302
          %v1304 = vsel %vm589, %v1301, 0
          %v1306 = vsel %vm589, %v1303, 0
          %1308 = vmatpush.msra.mxu0 0.0
          %1309 = vmatpush.msra.mxu0 0.0
          %1310 = vmatpush.msra.mxu0 0.0
          %1311 = vmatpush.msra.mxu0 0.0
          %1312 = vmatpush.msra.mxu0 0.0
          %1313 = vmatpush.msra.mxu0 0.0
          %1314 = vmatpush.msra.mxu0 0.0
          %1315 = vmatpush.msra.mxu0 0.0
          %1316 = vmatpush.msra.mxu0 0.0
          %1317 = vmatpush.msra.mxu0 0.0
          %1318 = vmatpush.msra.mxu0 0.0
          %1319 = vmatpush.msra.mxu0 0.0
          %1320 = vmatpush.msra.mxu0 0.0
          %1321 = vmatpush.msra.mxu0 0.0
          %1322 = vmatpush.msra.mxu0 %v1108
          %1323 = vmatpush.msra.mxu0 %v1107
          %1324 = vmatmul.f32.gmra.mxu0 %v1304
          %v1325 = vpop.f32.mrf.mxu0
          %v1326 = vadd.f32 0.0, %v1325
          %1327 = vmatmul.f32.gmra.mxu0 %v1306
          %v1328 = vpop.f32.mrf.mxu0
          %v1329 = vadd.f32 0.0, %v1328
          %1330 = vdwg.mxu0
          %v1331 = vmul.f32 %v1326, %v1262
          %v1332 = vmul.f32 %v1329, %v1263
          %v1333 = vsel %vm589, %v1331, 0.0
          %1334 = vadd.xlane.f32.xlu0 %v1333
          %v1335 = vpop.xlane.xlu0 %1334
          %v1336 = vsel %vm589, %v1332, 0.0
          %1337 = vadd.xlane.f32.xlu0 %v1336
          %v1338 = vpop.xlane.xlu0 %1337
          %v1339 = vadd.f32 %v1335, %v1295
          %v1340 = vadd.f32 %v1338, %v1295
          %v1341 = vsel %vm927, %v1159, %v1181
          %v1342 = vsel %vm927, %v1160, %v1182
          %vm1343 = vcmask 15360
          %v1344 = vsel %vm1343, %v1341, %v1223
          %v1345 = vsel %vm1343, %v1342, %v1224
          %vm1346 = vcmask 23552
          %v1347 = vsel %vm1346, %v1344, %v1233
          %v1348 = vsel %vm1346, %v1345, %v1234
          %vm1349 = vcmask 31744
          %v1350 = vsel %vm1349, %v1347, %v1296
          %v1351 = vsel %vm1349, %v1348, %v1297
          %vm1352 = vcmask 39936
          %v1353 = vsel %vm1352, %v1350, %v1339
          %v1354 = vsel %vm1352, %v1351, %v1340
          %vm1355 = vcmask 48128
          %v1356 = vsel %vm1355, %v1353, 0.0
          %v1357 = vsel %vm1355, %v1354, 0.0
          %1358 = vst [vmem:[%s13] sm:$0xff] %v1356
          %1359 = vst [vmem:[%s13 + $0x8] sm:$0xff] %v1357
        $region84: #{modeler_forward.1} parent=67 // pred_fallthru
          _
        %p1360 = scmp.lt.s32.totalorder %s30, 1
        %s1361 = scalar_select %p1360, %s30, 1
        %s1362 = smul.addr %s1361, 2
        %s1363 = smul.addr %s1362, 8
        %s1364 = scalar_lea.vmem %s12, %s1363
        // Predicated region
        $region85: #{modeler_forward.1} parent=67 // pred_check
          %p1365 = pneg %p325
        $region86: #{modeler_forward.1} parent=67 // pred_check_branch
          %1367 = sbr.rel (%p1365) target = $region88
        $region87: #{modeler_forward.1} parent=67 // pred_region
          _
        $region88: #{modeler_forward.1} parent=67 // pred_fallthru
          _
        // Predicated region
        $region89: #{modeler_forward.1} parent=67 // pred_check
          %p1368 = pneg %p346
        $region90: #{modeler_forward.1} parent=67 // pred_check_branch
          %1370 = sbr.rel (%p1368) target = $region92
        $region91: #{modeler_forward.1} parent=67 // pred_region
          _
        $region92: #{modeler_forward.1} parent=67 // pred_fallthru
          _
        // Predicated region
        $region93: #{modeler_forward.1} parent=67 // pred_check
          %p1371 = pneg %p346
        $region94: #{modeler_forward.1} parent=67 // pred_check_branch
          %1373 = sbr.rel (%p1371) target = $region96
        $region95: #{modeler_forward.1} parent=67 // pred_region
          _
        $region96: #{modeler_forward.1} parent=67 // pred_fallthru
          _
      $region68: #{modeler_forward.1} parent=5 // pred_fallthru
        _
      %p1374 = scmp.le.s32.totalorder 2, %s21
      // Predicated region
      $region97: #{modeler_forward.1} parent=5 // pred_check
        %p1375 = pneg %p1374
      $region98: #{modeler_forward.1} parent=5 // pred_check_branch
        %1377 = sbr.rel (%p1375) target = $region100
      $region99: #{modeler_forward.1} parent=5 // pred_region
        %s1378 = ssub.s32 %s21, 2
        // Predicated region
        $region101: #{modeler_forward.1} parent=99 // pred_check
          %p1379 = pneg %p331
        $region102: #{modeler_forward.1} parent=99 // pred_check_branch
          %1381 = sbr.rel (%p1379) target = $region104
        $region103: #{modeler_forward.1} parent=99 // pred_region
          %p1382 = scmp.lt.s32.totalorder %s32, 1
          %s1383 = scalar_select %p1382, %s32, 1
          %s1384 = smul.addr %s1383, 2
          %s1385 = smul.addr %s1384, 8
          %s1386 = scalar_lea.vmem %s12, %s1385
        $region104: #{modeler_forward.1} parent=99 // pred_fallthru
          _
      $region100: #{modeler_forward.1} parent=5 // pred_fallthru
        _
    $region6: #{modeler_forward.1} parent=1 // loop_footer
      %s25 = sadd.s32 1, %s21
    $region7: #{modeler_forward.1} parent=1 // loop_footer_branch
      %20 = sbr.rel target = $region3
    $region8: #{modeler_forward.1} parent=1 // loop_exit
      _
    %1387 = vsyncpa [#allocation5], 1
    %s1388 = scalar_lea.sflag [#allocation5], 1
    %1389 = vsyncpa %s1388, 1

</llo_original>
